<compile_context>
chip_gen: v7x
topology: tpu7x:2x2x1
jax: 0.10.0
libtpu: 0.0.40
codegen_flags: <defaults>
</compile_context>

<pallas_src>
import functools

import jax
import jax.numpy as jnp
from jax.experimental import pallas as pl
from jax.experimental.pallas import tpu as pltpu

_CONV_VMEM_LIMIT = 48 * 1024 * 1024   # fits v7x's 64 MiB VMEM with headroom
_EW_VMEM_LIMIT = 32 * 1024 * 1024


def _round_up(v, m):
    return (v + m - 1) // m * m


def _pick_m_tile(m, cap=2048):
    """Largest lane tile (multiple of 128, <= cap) dividing M rounded up to 128.

    Prefers >=2 tiles so both v7x TensorCores get work on the parallel M axis.
    Returns (tile, padded_m); padded_m == m whenever m is already a multiple of 128.
    """
    m_pad = _round_up(m, 128)
    cands = [t for t in range(128, min(m_pad, cap) + 1, 128) if m_pad % t == 0]
    multi = [t for t in cands if m_pad // t >= 2]
    tm = (multi[-1] if multi else cands[-1])
    return tm, m_pad


# ----------------------------- Pallas kernels ------------------------------

def _pconv_kernel(w_ref, xp_ref, msum_ref, out_ref, psum_ref, psq_ref, *,
                  slide_winsize):
    """One M tile of the partial conv.

    (C_out, K) x (K, tm) MXU matmul (bf16 operands, f32 accumulation), partial-conv
    mask renormalization, bf16 lane-dense store, fused per-tile BN partial sums
    taken from the f32 result (per-sublane row sums).
    """
    acc = jax.lax.dot_general(
        w_ref[...], xp_ref[...],
        dimension_numbers=(((1,), (0,)), ((), ())),
        preferred_element_type=jnp.float32)                   # (C_out, tm) f32

    msum = msum_ref[...]                                       # (1, tm) f32
    ratio = slide_winsize / (msum + 1e-8)                      # exact division
    update = jnp.clip(msum, 0.0, 1.0)
    out = acc * (ratio * update)                               # lane broadcast
    out_ref[...] = out.astype(out_ref.dtype)

    s = jnp.sum(out, axis=1, keepdims=True)                    # (C_out, 1)
    sq = jnp.sum(out * out, axis=1, keepdims=True)
    c_out = out.shape[0]
    if psum_ref.shape[0] == c_out:
        psum_ref[...] = jnp.broadcast_to(s, psum_ref.shape)
        psq_ref[...] = jnp.broadcast_to(sq, psq_ref.shape)
    else:  # stat tile rows padded up to a sublane multiple
        psum_ref[...] = jnp.zeros_like(psum_ref)
        psq_ref[...] = jnp.zeros_like(psq_ref)
        psum_ref[0:c_out, :] = jnp.broadcast_to(s, (c_out, psum_ref.shape[1]))
        psq_ref[0:c_out, :] = jnp.broadcast_to(sq, (c_out, psq_ref.shape[1]))


def _bn_silu_kernel(*refs, apply_mask):
    """y = SiLU(x*scale[c] + shift[c]) on a lane-dense (C, M) block.

    When apply_mask is True, also multiplies by a per-position (1, tm) mask so the
    next PartialConv's pre-masked input comes out of this single pass.
    """
    if apply_mask:
        x_ref, scale_ref, shift_ref, mul_ref, o_ref = refs
    else:
        x_ref, scale_ref, shift_ref, o_ref = refs
    y = x_ref[...].astype(jnp.float32) * scale_ref[:, 0:1] + shift_ref[:, 0:1]
    y = y * jax.nn.sigmoid(y)                                  # SiLU (EUP exp)
    if apply_mask:
        y = y * mul_ref[...]
    o_ref[...] = y.astype(o_ref.dtype)


# ------------------------------- JAX glue -----------------------------------

def _extract_patches_cf(xc, k, stride, padding):
    """Channel-first K-major im2col.

    xc: (C, N, D, H, W) -> patches (k^3*C, N*OD*OH*OW), rows ordered (kd, kh, kw, c).
    """
    c, n, d, h, w = xc.shape
    p, s = padding, stride
    xp = jnp.pad(xc, ((0, 0), (0, 0), (p, p), (p, p), (p, p)))
    dp, hp, wp = d + 2 * p, h + 2 * p, w + 2 * p
    od, oh, ow = (dp - k) // s + 1, (hp - k) // s + 1, (wp - k) // s + 1
    taps = []
    for kd in range(k):
        for kh in range(k):
            for kw in range(k):
                taps.append(xp[:, :,
                               kd:kd + s * (od - 1) + 1:s,
                               kh:kh + s * (oh - 1) + 1:s,
                               kw:kw + s * (ow - 1) + 1:s])
    pat = jnp.stack(taps, axis=0)                      # (k^3, C, N, OD, OH, OW)
    return pat.reshape(k * k * k * c, n * od * oh * ow), (od, oh, ow)


def _window_mask_sum(mask_sum_c, k, stride, padding):
    """Per output position: sum of the (channel-summed) mask over the k^3 window."""
    p = padding
    mp = jnp.pad(mask_sum_c, ((0, 0), (p, p), (p, p), (p, p)))
    return jax.lax.reduce_window(mp, 0.0, jax.lax.add,
                                 window_dimensions=(1, k, k, k),
                                 window_strides=(1, stride, stride, stride),
                                 padding="VALID")


def _partial_conv(xm_cf, msum, weight, *, stride, padding):
    """PartialConv3d core (bias=False, multi_channel=True) on a pre-masked input.

    xm_cf:  (C_in, N, D, H, W) bf16, already multiplied by the mask.
    msum:   (N, OD, OH, OW) f32, per-window mask sum (over window and C_in).
    weight: (C_out, C_in, k, k, k) f32.
    Returns (out (C_out, m_pad) bf16, bn_sum (C_out,), bn_sqsum (C_out,),
             m_true, (OD, OH, OW)).
    """
    c_out, c_in, k = weight.shape[0], weight.shape[1], weight.shape[2]
    slide_winsize = float(c_in * k * k * k)

    xp, (od, oh, ow) = _extract_patches_cf(xm_cf, k, stride, padding)
    kk, m = xp.shape
    wmat = jnp.transpose(weight, (0, 2, 3, 4, 1)).reshape(c_out, kk)
    wmat = wmat.astype(jnp.bfloat16)
    msum_row = msum.reshape(1, m).astype(jnp.float32)

    tm, m_pad = _pick_m_tile(m)
    if m_pad != m:                      # rare: only when M is not a 128 multiple
        xp = jnp.pad(xp, ((0, 0), (0, m_pad - m)))
        msum_row = jnp.pad(msum_row, ((0, 0), (0, m_pad - m)))
    n_mt = m_pad // tm
    sr = _round_up(c_out, 8)            # stat tile sublane rows

    out, psum, psq = pl.pallas_call(
        functools.partial(_pconv_kernel, slide_winsize=slide_winsize),
        out_shape=(jax.ShapeDtypeStruct((c_out, m_pad), jnp.bfloat16),
                   jax.ShapeDtypeStruct((n_mt * sr, 128), jnp.float32),
                   jax.ShapeDtypeStruct((n_mt * sr, 128), jnp.float32)),
        grid=(n_mt,),
        in_specs=[pl.BlockSpec((c_out, kk), lambda i: (0, 0)),   # resident weight
                  pl.BlockSpec((kk, tm), lambda i: (0, i)),
                  pl.BlockSpec((1, tm), lambda i: (0, i))],
        out_specs=(pl.BlockSpec((c_out, tm), lambda i: (0, i)),
                   pl.BlockSpec((sr, 128), lambda i: (i, 0)),
                   pl.BlockSpec((sr, 128), lambda i: (i, 0))),
        compiler_params=pltpu.CompilerParams(
            dimension_semantics=("parallel",),
            vmem_limit_bytes=_CONV_VMEM_LIMIT),
    )(wmat, xp, msum_row)

    # Padded columns are exactly zero (zero patch, update=0), so they do not
    # perturb the BN sums; the wrapper divides by the true element count.
    bn_sum = jnp.sum(psum.reshape(n_mt, sr, 128)[:, :c_out, 0], axis=0)
    bn_sq = jnp.sum(psq.reshape(n_mt, sr, 128)[:, :c_out, 0], axis=0)
    return out, bn_sum, bn_sq, m, (od, oh, ow)


def _bn_affine(psum, psq, gamma, beta, count, eps):
    """Fold training-mode BatchNorm3d batch statistics into scale/shift."""
    mean = psum / count
    var = jnp.maximum(psq / count - mean * mean, 0.0)          # biased variance
    scale = gamma.astype(jnp.float32) * jax.lax.rsqrt(var + eps)
    shift = beta.astype(jnp.float32) - mean * scale
    return scale, shift


def _bn_silu_apply(x_cm, scale, shift, *, mul, out_dtype):
    """SiLU(x*scale[c] + shift[c]) (optionally * per-position mask) on (C, M)."""
    c, mp = x_cm.shape
    assert mp % 128 == 0
    t, _ = _pick_m_tile(mp, cap=16384)
    n_t = mp // t

    scale2 = jnp.broadcast_to(scale.astype(jnp.float32)[:, None], (c, 128))
    shift2 = jnp.broadcast_to(shift.astype(jnp.float32)[:, None], (c, 128))

    in_arrays = [x_cm, scale2, shift2]
    in_specs = [pl.BlockSpec((c, t), lambda i: (0, i)),
                pl.BlockSpec((c, 128), lambda i: (0, 0)),
                pl.BlockSpec((c, 128), lambda i: (0, 0))]
    apply_mask = mul is not None
    if apply_mask:
        mulp = mul.astype(jnp.float32)
        if mulp.shape[1] != mp:
            mulp = jnp.pad(mulp, ((0, 0), (0, mp - mulp.shape[1])))
        in_arrays.append(mulp)
        in_specs.append(pl.BlockSpec((1, t), lambda i: (0, i)))

    return pl.pallas_call(
        functools.partial(_bn_silu_kernel, apply_mask=apply_mask),
        out_shape=jax.ShapeDtypeStruct((c, mp), out_dtype),
        grid=(n_t,),
        in_specs=in_specs,
        out_specs=pl.BlockSpec((c, t), lambda i: (0, i)),
        compiler_params=pltpu.CompilerParams(
            dimension_semantics=("parallel",),
            vmem_limit_bytes=_EW_VMEM_LIMIT),
    )(*in_arrays)


def inpainting_down_double_conv3d(x_ncdhw, mask_ncdhw, params, eps=1e-5):
    """Forward of InpaintingDownDoubleConv3D.  Inputs/outputs are NCDHW."""
    n = x_ncdhw.shape[0]
    xc = jnp.transpose(x_ncdhw, (1, 0, 2, 3, 4)).astype(jnp.float32)    # (C,N,D,H,W)
    mc = jnp.transpose(mask_ncdhw, (1, 0, 2, 3, 4)).astype(jnp.float32)

    # --- stage 1: PartialConv3d(k=7, pad=2, stride=2) -> BN -> SiLU (* mask) ----
    xm1 = (xc * mc).astype(jnp.bfloat16)
    msum1 = _window_mask_sum(jnp.sum(mc, axis=0), k=7, stride=2, padding=2)
    out1, ps1, pq1, m1, (od1, oh1, ow1) = _partial_conv(
        xm1, msum1, params["w1"], stride=2, padding=2)
    um1 = jnp.clip(msum1, 0.0, 1.0)          # update mask (identical per channel)
    sc1, sh1 = _bn_affine(ps1, pq1, params["gamma1"], params["beta1"], m1, eps)
    # Fused BN + SiLU + (x1 * update_mask): directly produces conv2's input.
    x1m = _bn_silu_apply(out1, sc1, sh1, mul=um1.reshape(1, m1),
                         out_dtype=jnp.bfloat16)

    # --- stage 2: PartialConv3d(k=3, pad=1, stride=1) -> BN -> SiLU -------------
    c_mid = x1m.shape[0]
    x1m_5d = x1m[:, :m1].reshape(c_mid, n, od1, oh1, ow1)
    msum2 = _window_mask_sum(um1 * float(c_mid), k=3, stride=1, padding=1)
    out2, ps2, pq2, m2, (od2, oh2, ow2) = _partial_conv(
        x1m_5d, msum2, params["w2"], stride=1, padding=1)
    um2 = jnp.clip(msum2, 0.0, 1.0)
    sc2, sh2 = _bn_affine(ps2, pq2, params["gamma2"], params["beta2"], m2, eps)
    x2 = _bn_silu_apply(out2, sc2, sh2, mul=None, out_dtype=jnp.float32)

    c_out = x2.shape[0]
    out = jnp.transpose(x2[:, :m2].reshape(c_out, n, od2, oh2, ow2),
                        (1, 0, 2, 3, 4))                                 # NCDHW
    out_mask = jnp.broadcast_to(um2[:, None],
                                (n, c_out, od2, oh2, ow2)).astype(jnp.float32)
    return out, out_mask


# --------------------------------- main --------------------------------------

if __name__ == "__main__":
    key = jax.random.PRNGKey(0)
    k1, k2, k3, k4, k5, k6, k7, k8 = jax.random.split(key, 8)

    N, C_IN, D = 2, 4, 10          # spatial 10 -> conv1 output spatial 4
    MID_C = OUT_C = 8

    x = jax.random.normal(k1, (N, C_IN, D, D, D), jnp.float32)
    mask_in = (jax.random.uniform(k2, (N, C_IN, D, D, D)) > 0.3).astype(jnp.float32)

    params = {
        "w1": 0.05 * jax.random.normal(k3, (MID_C, C_IN, 7, 7, 7), jnp.float32),
        "gamma1": 1.0 + 0.1 * jax.random.normal(k4, (MID_C,), jnp.float32),
        "beta1": 0.1 * jax.random.normal(k5, (MID_C,), jnp.float32),
        "w2": 0.1 * jax.random.normal(k6, (OUT_C, MID_C, 3, 3, 3), jnp.float32),
        "gamma2": 1.0 + 0.1 * jax.random.normal(k7, (OUT_C,), jnp.float32),
        "beta2": 0.1 * jax.random.normal(k8, (OUT_C,), jnp.float32),
    }

    fwd = jax.jit(inpainting_down_double_conv3d)
    out, out_mask = fwd(x, mask_in, params)
    jax.block_until_ready((out, out_mask))

    assert out.shape == (N, OUT_C, 4, 4, 4), out.shape
    assert out_mask.shape == (N, OUT_C, 4, 4, 4), out_mask.shape
    assert bool(jnp.all(jnp.isfinite(out))), "non-finite output"
    print("KERNEL_OK")
</pallas_src>

<mosaic_0001>
module attributes {stable_mosaic.version = 11 : i64} {
  func.func @_pconv_kernel(%arg0: i32, %arg1: memref<8x1372xbf16, #tpu.memory_space<vmem>>, %arg2: memref<1372x128xbf16, #tpu.memory_space<vmem>>, %arg3: memref<1x128xf32, #tpu.memory_space<vmem>>, %arg4: memref<8x128xbf16, #tpu.memory_space<vmem>>, %arg5: memref<8x128xf32, #tpu.memory_space<vmem>>, %arg6: memref<8x128xf32, #tpu.memory_space<vmem>>) attributes {dimension_semantics = [#tpu.dimension_semantics<parallel>], iteration_bounds = array<i64: 1>, scalar_prefetch = 0 : i64, scratch_operands = 0 : i64, tpu.core_type = #tpu.core_type<tc>, window_params = [{pipeline_mode = #tpu.pipeline_mode<synchronous>, transform_indices = @transform_0, window_bounds = array<i64: 8, 1372>}, {transform_indices = @transform_1, window_bounds = array<i64: 1372, 128>}, {transform_indices = @transform_2, window_bounds = array<i64: 1, 128>}, {transform_indices = @transform_3, window_bounds = array<i64: 8, 128>}, {transform_indices = @transform_4, window_bounds = array<i64: 8, 128>}, {transform_indices = @transform_5, window_bounds = array<i64: 8, 128>}]} {
    %c0 = arith.constant 0 : index
    %c0_0 = arith.constant 0 : index
    %0 = vector.load %arg1[%c0, %c0_0] : memref<8x1372xbf16, #tpu.memory_space<vmem>>, vector<8x1372xbf16>
    %c0_1 = arith.constant 0 : index
    %c0_2 = arith.constant 0 : index
    %1 = vector.load %arg2[%c0_1, %c0_2] : memref<1372x128xbf16, #tpu.memory_space<vmem>>, vector<1372x128xbf16>
    %cst = arith.constant dense<0.000000e+00> : vector<8x128xf32>
    %2 = tpu.matmul %0, %1, %cst {dimension_numbers = #tpu.dot_dimension_numbers<[1], [0], [0], [1], [0, 0, 1, 1], [], []>} : vector<8x1372xbf16>, vector<1372x128xbf16>, vector<8x128xf32> -> vector<8x128xf32>
    %c0_3 = arith.constant 0 : index
    %c0_4 = arith.constant 0 : index
    %3 = vector.load %arg3[%c0_3, %c0_4] : memref<1x128xf32, #tpu.memory_space<vmem>>, vector<1x128xf32>
    %cst_5 = arith.constant 9.99999993E-9 : f32
    %4 = vector.broadcast %cst_5 : f32 to vector<1x128xf32>
    %5 = arith.addf %3, %4 : vector<1x128xf32>
    %cst_6 = arith.constant 1.372000e+03 : f32
    %6 = vector.broadcast %cst_6 : f32 to vector<1x128xf32>
    %7 = arith.divf %6, %5 : vector<1x128xf32>
    %cst_7 = arith.constant 0.000000e+00 : f32
    %cst_8 = arith.constant 1.000000e+00 : f32
    %8 = vector.broadcast %cst_7 : f32 to vector<1x128xf32>
    %9 = arith.maximumf %8, %3 : vector<1x128xf32>
    %10 = vector.broadcast %cst_8 : f32 to vector<1x128xf32>
    %11 = arith.minimumf %10, %9 : vector<1x128xf32>
    %12 = arith.mulf %7, %11 : vector<1x128xf32>
    %13 = vector.broadcast %12 : vector<1x128xf32> to vector<8x128xf32>
    %14 = arith.mulf %2, %13 : vector<8x128xf32>
    %15 = arith.truncf %14 : vector<8x128xf32> to vector<8x128xbf16>
    %c0_9 = arith.constant 0 : index
    %c0_10 = arith.constant 0 : index
    %16 = vector.load %arg4[%c0_9, %c0_10] : memref<8x128xbf16, #tpu.memory_space<vmem>>, vector<8x128xbf16>
    tpu.vector_store %arg4[%c0_9, %c0_10], %15 {strides = array<i32>} : memref<8x128xbf16, #tpu.memory_space<vmem>>, vector<8x128xbf16>,
    %cst_11 = arith.constant dense<0.000000e+00> : vector<8xf32>
    %17 = vector.multi_reduction <add>, %14, %cst_11 [1] : vector<8x128xf32> to vector<8xf32>
    %18 = vector.shape_cast %17 : vector<8xf32> to vector<8x1xf32>
    %19 = arith.mulf %14, %14 : vector<8x128xf32>
    %cst_12 = arith.constant dense<0.000000e+00> : vector<8xf32>
    %20 = vector.multi_reduction <add>, %19, %cst_12 [1] : vector<8x128xf32> to vector<8xf32>
    %21 = vector.shape_cast %20 : vector<8xf32> to vector<8x1xf32>
    %22 = vector.shape_cast %18 : vector<8x1xf32> to vector<8x1xf32>
    %23 = vector.broadcast %22 : vector<8x1xf32> to vector<8x128xf32>
    %c0_13 = arith.constant 0 : index
    %c0_14 = arith.constant 0 : index
    %24 = vector.load %arg5[%c0_13, %c0_14] : memref<8x128xf32, #tpu.memory_space<vmem>>, vector<8x128xf32>
    tpu.vector_store %arg5[%c0_13, %c0_14], %23 {strides = array<i32>} : memref<8x128xf32, #tpu.memory_space<vmem>>, vector<8x128xf32>,
    %25 = vector.shape_cast %21 : vector<8x1xf32> to vector<8x1xf32>
    %26 = vector.broadcast %25 : vector<8x1xf32> to vector<8x128xf32>
    %c0_15 = arith.constant 0 : index
    %c0_16 = arith.constant 0 : index
    %27 = vector.load %arg6[%c0_15, %c0_16] : memref<8x128xf32, #tpu.memory_space<vmem>>, vector<8x128xf32>
    tpu.vector_store %arg6[%c0_15, %c0_16], %26 {strides = array<i32>} : memref<8x128xf32, #tpu.memory_space<vmem>>, vector<8x128xf32>,
    return
  }
  func.func @transform_0(%arg0: i32) -> (i32, i32) {
    %c0_i32 = arith.constant 0 : i32
    %c0_i32_0 = arith.constant 0 : i32
    %c0_i32_1 = arith.constant 0 : i32
    return %c0_i32, %c0_i32_0 : i32, i32
  }
  func.func @transform_1(%arg0: i32) -> (i32, i32) {
    %c0_i32 = arith.constant 0 : i32
    %c0_i32_0 = arith.constant 0 : i32
    return %c0_i32, %arg0 : i32, i32
  }
  func.func @transform_2(%arg0: i32) -> (i32, i32) {
    %c0_i32 = arith.constant 0 : i32
    %c0_i32_0 = arith.constant 0 : i32
    return %c0_i32, %arg0 : i32, i32
  }
  func.func @transform_3(%arg0: i32) -> (i32, i32) {
    %c0_i32 = arith.constant 0 : i32
    %c0_i32_0 = arith.constant 0 : i32
    return %c0_i32, %arg0 : i32, i32
  }
  func.func @transform_4(%arg0: i32) -> (i32, i32) {
    %c0_i32 = arith.constant 0 : i32
    %c0_i32_0 = arith.constant 0 : i32
    return %arg0, %c0_i32 : i32, i32
  }
  func.func @transform_5(%arg0: i32) -> (i32, i32) {
    %c0_i32 = arith.constant 0 : i32
    %c0_i32_0 = arith.constant 0 : i32
    return %arg0, %c0_i32 : i32, i32
  }
}

module attributes {stable_mosaic.version = 11 : i64} {
  func.func @_bn_silu_kernel(%arg0: i32, %arg1: memref<8x128xbf16, #tpu.memory_space<vmem>>, %arg2: memref<8x128xf32, #tpu.memory_space<vmem>>, %arg3: memref<8x128xf32, #tpu.memory_space<vmem>>, %arg4: memref<1x128xf32, #tpu.memory_space<vmem>>, %arg5: memref<8x128xbf16, #tpu.memory_space<vmem>>) attributes {dimension_semantics = [#tpu.dimension_semantics<parallel>], iteration_bounds = array<i64: 1>, scalar_prefetch = 0 : i64, scratch_operands = 0 : i64, tpu.core_type = #tpu.core_type<tc>, window_params = [{transform_indices = @transform_0, window_bounds = array<i64: 8, 128>}, {pipeline_mode = #tpu.pipeline_mode<synchronous>, transform_indices = @transform_1, window_bounds = array<i64: 8, 128>}, {pipeline_mode = #tpu.pipeline_mode<synchronous>, transform_indices = @transform_2, window_bounds = array<i64: 8, 128>}, {transform_indices = @transform_3, window_bounds = array<i64: 1, 128>}, {transform_indices = @transform_4, window_bounds = array<i64: 8, 128>}]} {
    %c0 = arith.constant 0 : index
    %c0_0 = arith.constant 0 : index
    %0 = vector.load %arg1[%c0, %c0_0] : memref<8x128xbf16, #tpu.memory_space<vmem>>, vector<8x128xbf16>
    %1 = arith.extf %0 : vector<8x128xbf16> to vector<8x128xf32>
    %c0_1 = arith.constant 0 : index
    %c0_2 = arith.constant 0 : index
    %2 = vector.load %arg2[%c0_1, %c0_2] : memref<8x128xf32, #tpu.memory_space<vmem>>, vector<8x1xf32>
    %3 = vector.broadcast %2 : vector<8x1xf32> to vector<8x128xf32>
    %4 = arith.mulf %1, %3 : vector<8x128xf32>
    %c0_3 = arith.constant 0 : index
    %c0_4 = arith.constant 0 : index
    %5 = vector.load %arg3[%c0_3, %c0_4] : memref<8x128xf32, #tpu.memory_space<vmem>>, vector<8x1xf32>
    %6 = vector.broadcast %5 : vector<8x1xf32> to vector<8x128xf32>
    %7 = arith.addf %4, %6 : vector<8x128xf32>
    %8 = arith.negf %7 : vector<8x128xf32>
    %9 = math.exp %8 : vector<8x128xf32>
    %cst = arith.constant 1.000000e+00 : f32
    %10 = vector.broadcast %cst : f32 to vector<8x128xf32>
    %11 = arith.addf %10, %9 : vector<8x128xf32>
    %12 = arith.divf %10, %11 : vector<8x128xf32>
    %13 = arith.mulf %7, %12 : vector<8x128xf32>
    %c0_5 = arith.constant 0 : index
    %c0_6 = arith.constant 0 : index
    %14 = vector.load %arg4[%c0_5, %c0_6] : memref<1x128xf32, #tpu.memory_space<vmem>>, vector<1x128xf32>
    %15 = vector.broadcast %14 : vector<1x128xf32> to vector<8x128xf32>
    %16 = arith.mulf %13, %15 : vector<8x128xf32>
    %17 = arith.truncf %16 : vector<8x128xf32> to vector<8x128xbf16>
    %c0_7 = arith.constant 0 : index
    %c0_8 = arith.constant 0 : index
    %18 = vector.load %arg5[%c0_7, %c0_8] : memref<8x128xbf16, #tpu.memory_space<vmem>>, vector<8x128xbf16>
    tpu.vector_store %arg5[%c0_7, %c0_8], %17 {strides = array<i32>} : memref<8x128xbf16, #tpu.memory_space<vmem>>, vector<8x128xbf16>,
    return
  }
  func.func @transform_0(%arg0: i32) -> (i32, i32) {
    %c0_i32 = arith.constant 0 : i32
    %c0_i32_0 = arith.constant 0 : i32
    return %c0_i32, %arg0 : i32, i32
  }
  func.func @transform_1(%arg0: i32) -> (i32, i32) {
    %c0_i32 = arith.constant 0 : i32
    %c0_i32_0 = arith.constant 0 : i32
    %c0_i32_1 = arith.constant 0 : i32
    return %c0_i32, %c0_i32_0 : i32, i32
  }
  func.func @transform_2(%arg0: i32) -> (i32, i32) {
    %c0_i32 = arith.constant 0 : i32
    %c0_i32_0 = arith.constant 0 : i32
    %c0_i32_1 = arith.constant 0 : i32
    return %c0_i32, %c0_i32_0 : i32, i32
  }
  func.func @transform_3(%arg0: i32) -> (i32, i32) {
    %c0_i32 = arith.constant 0 : i32
    %c0_i32_0 = arith.constant 0 : i32
    return %c0_i32, %arg0 : i32, i32
  }
  func.func @transform_4(%arg0: i32) -> (i32, i32) {
    %c0_i32 = arith.constant 0 : i32
    %c0_i32_0 = arith.constant 0 : i32
    return %c0_i32, %arg0 : i32, i32
  }
}

module attributes {stable_mosaic.version = 11 : i64} {
  func.func @_pconv_kernel(%arg0: i32, %arg1: memref<8x216xbf16, #tpu.memory_space<vmem>>, %arg2: memref<216x128xbf16, #tpu.memory_space<vmem>>, %arg3: memref<1x128xf32, #tpu.memory_space<vmem>>, %arg4: memref<8x128xbf16, #tpu.memory_space<vmem>>, %arg5: memref<8x128xf32, #tpu.memory_space<vmem>>, %arg6: memref<8x128xf32, #tpu.memory_space<vmem>>) attributes {dimension_semantics = [#tpu.dimension_semantics<parallel>], iteration_bounds = array<i64: 1>, scalar_prefetch = 0 : i64, scratch_operands = 0 : i64, tpu.core_type = #tpu.core_type<tc>, window_params = [{pipeline_mode = #tpu.pipeline_mode<synchronous>, transform_indices = @transform_0, window_bounds = array<i64: 8, 216>}, {transform_indices = @transform_1, window_bounds = array<i64: 216, 128>}, {transform_indices = @transform_2, window_bounds = array<i64: 1, 128>}, {transform_indices = @transform_3, window_bounds = array<i64: 8, 128>}, {transform_indices = @transform_4, window_bounds = array<i64: 8, 128>}, {transform_indices = @transform_5, window_bounds = array<i64: 8, 128>}]} {
    %c0 = arith.constant 0 : index
    %c0_0 = arith.constant 0 : index
    %0 = vector.load %arg1[%c0, %c0_0] : memref<8x216xbf16, #tpu.memory_space<vmem>>, vector<8x216xbf16>
    %c0_1 = arith.constant 0 : index
    %c0_2 = arith.constant 0 : index
    %1 = vector.load %arg2[%c0_1, %c0_2] : memref<216x128xbf16, #tpu.memory_space<vmem>>, vector<216x128xbf16>
    %cst = arith.constant dense<0.000000e+00> : vector<8x128xf32>
    %2 = tpu.matmul %0, %1, %cst {dimension_numbers = #tpu.dot_dimension_numbers<[1], [0], [0], [1], [0, 0, 1, 1], [], []>} : vector<8x216xbf16>, vector<216x128xbf16>, vector<8x128xf32> -> vector<8x128xf32>
    %c0_3 = arith.constant 0 : index
    %c0_4 = arith.constant 0 : index
    %3 = vector.load %arg3[%c0_3, %c0_4] : memref<1x128xf32, #tpu.memory_space<vmem>>, vector<1x128xf32>
    %cst_5 = arith.constant 9.99999993E-9 : f32
    %4 = vector.broadcast %cst_5 : f32 to vector<1x128xf32>
    %5 = arith.addf %3, %4 : vector<1x128xf32>
    %cst_6 = arith.constant 2.160000e+02 : f32
    %6 = vector.broadcast %cst_6 : f32 to vector<1x128xf32>
    %7 = arith.divf %6, %5 : vector<1x128xf32>
    %cst_7 = arith.constant 0.000000e+00 : f32
    %cst_8 = arith.constant 1.000000e+00 : f32
    %8 = vector.broadcast %cst_7 : f32 to vector<1x128xf32>
    %9 = arith.maximumf %8, %3 : vector<1x128xf32>
    %10 = vector.broadcast %cst_8 : f32 to vector<1x128xf32>
    %11 = arith.minimumf %10, %9 : vector<1x128xf32>
    %12 = arith.mulf %7, %11 : vector<1x128xf32>
    %13 = vector.broadcast %12 : vector<1x128xf32> to vector<8x128xf32>
    %14 = arith.mulf %2, %13 : vector<8x128xf32>
    %15 = arith.truncf %14 : vector<8x128xf32> to vector<8x128xbf16>
    %c0_9 = arith.constant 0 : index
    %c0_10 = arith.constant 0 : index
    %16 = vector.load %arg4[%c0_9, %c0_10] : memref<8x128xbf16, #tpu.memory_space<vmem>>, vector<8x128xbf16>
    tpu.vector_store %arg4[%c0_9, %c0_10], %15 {strides = array<i32>} : memref<8x128xbf16, #tpu.memory_space<vmem>>, vector<8x128xbf16>,
    %cst_11 = arith.constant dense<0.000000e+00> : vector<8xf32>
    %17 = vector.multi_reduction <add>, %14, %cst_11 [1] : vector<8x128xf32> to vector<8xf32>
    %18 = vector.shape_cast %17 : vector<8xf32> to vector<8x1xf32>
    %19 = arith.mulf %14, %14 : vector<8x128xf32>
    %cst_12 = arith.constant dense<0.000000e+00> : vector<8xf32>
    %20 = vector.multi_reduction <add>, %19, %cst_12 [1] : vector<8x128xf32> to vector<8xf32>
    %21 = vector.shape_cast %20 : vector<8xf32> to vector<8x1xf32>
    %22 = vector.shape_cast %18 : vector<8x1xf32> to vector<8x1xf32>
    %23 = vector.broadcast %22 : vector<8x1xf32> to vector<8x128xf32>
    %c0_13 = arith.constant 0 : index
    %c0_14 = arith.constant 0 : index
    %24 = vector.load %arg5[%c0_13, %c0_14] : memref<8x128xf32, #tpu.memory_space<vmem>>, vector<8x128xf32>
    tpu.vector_store %arg5[%c0_13, %c0_14], %23 {strides = array<i32>} : memref<8x128xf32, #tpu.memory_space<vmem>>, vector<8x128xf32>,
    %25 = vector.shape_cast %21 : vector<8x1xf32> to vector<8x1xf32>
    %26 = vector.broadcast %25 : vector<8x1xf32> to vector<8x128xf32>
    %c0_15 = arith.constant 0 : index
    %c0_16 = arith.constant 0 : index
    %27 = vector.load %arg6[%c0_15, %c0_16] : memref<8x128xf32, #tpu.memory_space<vmem>>, vector<8x128xf32>
    tpu.vector_store %arg6[%c0_15, %c0_16], %26 {strides = array<i32>} : memref<8x128xf32, #tpu.memory_space<vmem>>, vector<8x128xf32>,
    return
  }
  func.func @transform_0(%arg0: i32) -> (i32, i32) {
    %c0_i32 = arith.constant 0 : i32
    %c0_i32_0 = arith.constant 0 : i32
    %c0_i32_1 = arith.constant 0 : i32
    return %c0_i32, %c0_i32_0 : i32, i32
  }
  func.func @transform_1(%arg0: i32) -> (i32, i32) {
    %c0_i32 = arith.constant 0 : i32
    %c0_i32_0 = arith.constant 0 : i32
    return %c0_i32, %arg0 : i32, i32
  }
  func.func @transform_2(%arg0: i32) -> (i32, i32) {
    %c0_i32 = arith.constant 0 : i32
    %c0_i32_0 = arith.constant 0 : i32
    return %c0_i32, %arg0 : i32, i32
  }
  func.func @transform_3(%arg0: i32) -> (i32, i32) {
    %c0_i32 = arith.constant 0 : i32
    %c0_i32_0 = arith.constant 0 : i32
    return %c0_i32, %arg0 : i32, i32
  }
  func.func @transform_4(%arg0: i32) -> (i32, i32) {
    %c0_i32 = arith.constant 0 : i32
    %c0_i32_0 = arith.constant 0 : i32
    return %arg0, %c0_i32 : i32, i32
  }
  func.func @transform_5(%arg0: i32) -> (i32, i32) {
    %c0_i32 = arith.constant 0 : i32
    %c0_i32_0 = arith.constant 0 : i32
    return %arg0, %c0_i32 : i32, i32
  }
}

module attributes {stable_mosaic.version = 11 : i64} {
  func.func @_bn_silu_kernel(%arg0: i32, %arg1: memref<8x128xbf16, #tpu.memory_space<vmem>>, %arg2: memref<8x128xf32, #tpu.memory_space<vmem>>, %arg3: memref<8x128xf32, #tpu.memory_space<vmem>>, %arg4: memref<8x128xf32, #tpu.memory_space<vmem>>) attributes {dimension_semantics = [#tpu.dimension_semantics<parallel>], iteration_bounds = array<i64: 1>, scalar_prefetch = 0 : i64, scratch_operands = 0 : i64, tpu.core_type = #tpu.core_type<tc>, window_params = [{transform_indices = @transform_0, window_bounds = array<i64: 8, 128>}, {pipeline_mode = #tpu.pipeline_mode<synchronous>, transform_indices = @transform_1, window_bounds = array<i64: 8, 128>}, {pipeline_mode = #tpu.pipeline_mode<synchronous>, transform_indices = @transform_2, window_bounds = array<i64: 8, 128>}, {transform_indices = @transform_3, window_bounds = array<i64: 8, 128>}]} {
    %c0 = arith.constant 0 : index
    %c0_0 = arith.constant 0 : index
    %0 = vector.load %arg1[%c0, %c0_0] : memref<8x128xbf16, #tpu.memory_space<vmem>>, vector<8x128xbf16>
    %1 = arith.extf %0 : vector<8x128xbf16> to vector<8x128xf32>
    %c0_1 = arith.constant 0 : index
    %c0_2 = arith.constant 0 : index
    %2 = vector.load %arg2[%c0_1, %c0_2] : memref<8x128xf32, #tpu.memory_space<vmem>>, vector<8x1xf32>
    %3 = vector.broadcast %2 : vector<8x1xf32> to vector<8x128xf32>
    %4 = arith.mulf %1, %3 : vector<8x128xf32>
    %c0_3 = arith.constant 0 : index
    %c0_4 = arith.constant 0 : index
    %5 = vector.load %arg3[%c0_3, %c0_4] : memref<8x128xf32, #tpu.memory_space<vmem>>, vector<8x1xf32>
    %6 = vector.broadcast %5 : vector<8x1xf32> to vector<8x128xf32>
    %7 = arith.addf %4, %6 : vector<8x128xf32>
    %8 = arith.negf %7 : vector<8x128xf32>
    %9 = math.exp %8 : vector<8x128xf32>
    %cst = arith.constant 1.000000e+00 : f32
    %10 = vector.broadcast %cst : f32 to vector<8x128xf32>
    %11 = arith.addf %10, %9 : vector<8x128xf32>
    %12 = arith.divf %10, %11 : vector<8x128xf32>
    %13 = arith.mulf %7, %12 : vector<8x128xf32>
    %c0_5 = arith.constant 0 : index
    %c0_6 = arith.constant 0 : index
    %14 = vector.load %arg4[%c0_5, %c0_6] : memref<8x128xf32, #tpu.memory_space<vmem>>, vector<8x128xf32>
    tpu.vector_store %arg4[%c0_5, %c0_6], %13 {strides = array<i32>} : memref<8x128xf32, #tpu.memory_space<vmem>>, vector<8x128xf32>,
    return
  }
  func.func @transform_0(%arg0: i32) -> (i32, i32) {
    %c0_i32 = arith.constant 0 : i32
    %c0_i32_0 = arith.constant 0 : i32
    return %c0_i32, %arg0 : i32, i32
  }
  func.func @transform_1(%arg0: i32) -> (i32, i32) {
    %c0_i32 = arith.constant 0 : i32
    %c0_i32_0 = arith.constant 0 : i32
    %c0_i32_1 = arith.constant 0 : i32
    return %c0_i32, %c0_i32_0 : i32, i32
  }
  func.func @transform_2(%arg0: i32) -> (i32, i32) {
    %c0_i32 = arith.constant 0 : i32
    %c0_i32_0 = arith.constant 0 : i32
    %c0_i32_1 = arith.constant 0 : i32
    return %c0_i32, %c0_i32_0 : i32, i32
  }
  func.func @transform_3(%arg0: i32) -> (i32, i32) {
    %c0_i32 = arith.constant 0 : i32
    %c0_i32_0 = arith.constant 0 : i32
    return %c0_i32, %arg0 : i32, i32
  }
}

</mosaic_0001>

<llo_original>
// kernel: inpainting_down_double_conv3d.5
$region0: #{inpainting_down_double_conv3d.5}
  #allocation0 [shape = 'u32[]', space=smem, size = 0x4, offset = 0x4, fixed_abs, tag = 'smem constant byte address 0x4 - core index']
  #allocation1 [shape = 'u32[144,128]{1,0:T(1,128)}', space=vmem, size = 0x12000, scoped, tag = 'internal scratch']
  %s0 = inlined_call_operand.vmem [shape: bf16[8,128], index: 0, kind: input, shape index: {}]
  %s1 = inlined_call_operand.vmem [shape: f32[8,128], index: 1, kind: input, shape index: {}]
  %s2 = inlined_call_operand.vmem [shape: f32[8,128], index: 2, kind: input, shape index: {}]
  %s3 = inlined_call_operand.vmem [shape: f32[1,128], index: 3, kind: input, shape index: {}]
  %s4 = inlined_call_operand.vmem [shape: bf16[8,128], index: 4, kind: output, shape index: {}]
  %s5 = sld [smem:[#allocation0]]
  $region26: #{inpainting_down_double_conv3d.5} parent=0
    _
  %s7 = ssub.s32 1, %s5
  %s8 = scalar_select 0, %s7, %s5
  // Predicated region
  $region2: #{inpainting_down_double_conv3d.5} parent=0 // pred_check
    _
  $region3: #{inpainting_down_double_conv3d.5} parent=0 // pred_check_branch
    %10 = sbr.rel (0) target = $region5
  $region4: #{inpainting_down_double_conv3d.5} parent=0 // pred_region
    _
  $region5: #{inpainting_down_double_conv3d.5} parent=0 // pred_fallthru
    _
  // Predicated region
  $region6: #{inpainting_down_double_conv3d.5} parent=0 // pred_check
    _
  $region7: #{inpainting_down_double_conv3d.5} parent=0 // pred_check_branch
    %12 = sbr.rel (0) target = $region9
  $region8: #{inpainting_down_double_conv3d.5} parent=0 // pred_region
    _
  $region9: #{inpainting_down_double_conv3d.5} parent=0 // pred_fallthru
    _
  // Predicated region
  $region10: #{inpainting_down_double_conv3d.5} parent=0 // pred_check
    _
  $region11: #{inpainting_down_double_conv3d.5} parent=0 // pred_check_branch
    %14 = sbr.rel (0) target = $region13
  $region12: #{inpainting_down_double_conv3d.5} parent=0 // pred_region
    _
  $region13: #{inpainting_down_double_conv3d.5} parent=0 // pred_fallthru
    _
  // Predicated region
  $region14: #{inpainting_down_double_conv3d.5} parent=0 // pred_check
    _
  $region15: #{inpainting_down_double_conv3d.5} parent=0 // pred_check_branch
    %16 = sbr.rel (0) target = $region17
  $region16: #{inpainting_down_double_conv3d.5} parent=0 // pred_region
    _
  $region17: #{inpainting_down_double_conv3d.5} parent=0 // pred_fallthru
    _
  %v17 = vld [vmem:[%s0] sm:$0xf]
  %v18 = vunpack.c.l.bf16 %v17
  %v19 = vld [vmem:[%s1] sm:$0xff]
  %21 = vset.pattern.permute.xlu0 0
  %22 = vperm.xlu0 %21, %v19
  %v23 = vpop.permute.xlu0 %22
  %v25 = vmul.f32 %v18, %v23
  %v26 = vld [vmem:[%s2] sm:$0xff]
  %28 = vset.pattern.permute.xlu0 0
  %29 = vperm.xlu0 %28, %v26
  %v30 = vpop.permute.xlu0 %29
  %v32 = vadd.f32 %v25, %v30
  %v33 = vxor.u32 %v32, 2147483648
  %v34 = vmul.f32 %v33, 1.442695
  %v35 = vpow.pop %v34
  %v36 = vadd.f32 %v35, 1.0
  %v37 = vrcp.pop %v36
  %v38 = vmul.f32 1.0, %v37
  %v39 = vmul.f32 %v32, %v38
  %v40 = vld [vmem:[%s3] sm:$0x1]
  %v42 = vlaneseq
  %v43 = vshrl.u32 %v42, 7
  %v44 = vsub.s32 0, %v43
  %v45 = vrot.slane %v40, %v44
  %v47 = vmul.f32 %v39, %v45
  %v48 = vpack.c.bf16 %v47, %v47
  %49 = vst [vmem:[%s4] sm:$0xf] %v48
  // Predicated region
  $region18: #{inpainting_down_double_conv3d.5} parent=0 // pred_check
    _
  $region19: #{inpainting_down_double_conv3d.5} parent=0 // pred_check_branch
    %51 = sbr.rel (0) target = $region21
  $region20: #{inpainting_down_double_conv3d.5} parent=0 // pred_region
    _
  $region21: #{inpainting_down_double_conv3d.5} parent=0 // pred_fallthru
    _
  // Predicated region
  $region22: #{inpainting_down_double_conv3d.5} parent=0 // pred_check
    _
  $region23: #{inpainting_down_double_conv3d.5} parent=0 // pred_check_branch
    %53 = sbr.rel (0) target = $region25
  $region24: #{inpainting_down_double_conv3d.5} parent=0 // pred_region
    _
  $region25: #{inpainting_down_double_conv3d.5} parent=0 // pred_fallthru
    _

// kernel: inpainting_down_double_conv3d.4
$region0: #{inpainting_down_double_conv3d.4}
  #allocation0 [shape = 'u32[]', space=smem, size = 0x4, offset = 0x4, fixed_abs, tag = 'smem constant byte address 0x4 - core index']
  #allocation1 [shape = 'u32[144,128]{1,0:T(1,128)}', space=vmem, size = 0x12000, scoped, tag = 'internal scratch']
  %s0 = inlined_call_operand.vmem [shape: bf16[8,1372], index: 0, kind: input, shape index: {}]
  %s1 = inlined_call_operand.vmem [shape: bf16[1372,128], index: 1, kind: input, shape index: {}]
  %s2 = inlined_call_operand.vmem [shape: f32[1,128], index: 2, kind: input, shape index: {}]
  %s3 = inlined_call_operand.vmem [shape: bf16[8,128], index: 3, kind: output, shape index: {0}]
  %s4 = inlined_call_operand.vmem [shape: f32[8,128], index: 4, kind: output, shape index: {1}]
  %s5 = inlined_call_operand.vmem [shape: f32[8,128], index: 5, kind: output, shape index: {2}]
  %6 = xla_tuple %s3, %s4, %s5
  %s7 = sld [smem:[#allocation0]]
  $region38: #{inpainting_down_double_conv3d.4} parent=0
    _
  %s9 = ssub.s32 1, %s7
  %s10 = scalar_select 0, %s9, %s7
  // Predicated region
  $region2: #{inpainting_down_double_conv3d.4} parent=0 // pred_check
    _
  $region3: #{inpainting_down_double_conv3d.4} parent=0 // pred_check_branch
    %12 = sbr.rel (0) target = $region5
  $region4: #{inpainting_down_double_conv3d.4} parent=0 // pred_region
    _
  $region5: #{inpainting_down_double_conv3d.4} parent=0 // pred_fallthru
    _
  // Predicated region
  $region6: #{inpainting_down_double_conv3d.4} parent=0 // pred_check
    _
  $region7: #{inpainting_down_double_conv3d.4} parent=0 // pred_check_branch
    %14 = sbr.rel (0) target = $region9
  $region8: #{inpainting_down_double_conv3d.4} parent=0 // pred_region
    _
  $region9: #{inpainting_down_double_conv3d.4} parent=0 // pred_fallthru
    _
  // Predicated region
  $region10: #{inpainting_down_double_conv3d.4} parent=0 // pred_check
    _
  $region11: #{inpainting_down_double_conv3d.4} parent=0 // pred_check_branch
    %16 = sbr.rel (0) target = $region13
  $region12: #{inpainting_down_double_conv3d.4} parent=0 // pred_region
    _
  $region13: #{inpainting_down_double_conv3d.4} parent=0 // pred_fallthru
    _
  %v18 = vld [vmem:[%s0] sm:$0xff]
  %v19 = vld [vmem:[%s0 + $0x8] sm:$0xff]
  %v20 = vld [vmem:[%s0 + $0x10] sm:$0xff]
  %v21 = vld [vmem:[%s0 + $0x18] sm:$0xff]
  %v22 = vld [vmem:[%s0 + $0x20] sm:$0xff]
  %v23 = vld [vmem:[%s0 + $0x28] sm:$0xf]
  %v24 = vld [vmem:[%s1] sm:$0xf]
  %v25 = vld [vmem:[%s1 + $0x4] sm:$0xf]
  %v26 = vld [vmem:[%s1 + $0x8] sm:$0xf]
  %v27 = vld [vmem:[%s1 + $0xc] sm:$0xf]
  %v28 = vld [vmem:[%s1 + $0x10] sm:$0xf]
  %v29 = vld [vmem:[%s1 + $0x14] sm:$0xf]
  %v30 = vld [vmem:[%s1 + $0x18] sm:$0xf]
  %v31 = vld [vmem:[%s1 + $0x1c] sm:$0xf]
  %v32 = vld [vmem:[%s1 + $0x20] sm:$0xf]
  %v33 = vld [vmem:[%s1 + $0x24] sm:$0xf]
  %v34 = vld [vmem:[%s1 + $0x28] sm:$0xf]
  %v35 = vld [vmem:[%s1 + $0x2c] sm:$0xf]
  %v36 = vld [vmem:[%s1 + $0x30] sm:$0xf]
  %v37 = vld [vmem:[%s1 + $0x34] sm:$0xf]
  %v38 = vld [vmem:[%s1 + $0x38] sm:$0xf]
  %v39 = vld [vmem:[%s1 + $0x3c] sm:$0xf]
  %v40 = vld [vmem:[%s1 + $0x40] sm:$0xf]
  %v41 = vld [vmem:[%s1 + $0x44] sm:$0xf]
  %v42 = vld [vmem:[%s1 + $0x48] sm:$0xf]
  %v43 = vld [vmem:[%s1 + $0x4c] sm:$0xf]
  %v44 = vld [vmem:[%s1 + $0x50] sm:$0xf]
  %v45 = vld [vmem:[%s1 + $0x54] sm:$0xf]
  %v46 = vld [vmem:[%s1 + $0x58] sm:$0xf]
  %v47 = vld [vmem:[%s1 + $0x5c] sm:$0xf]
  %v48 = vld [vmem:[%s1 + $0x60] sm:$0xf]
  %v49 = vld [vmem:[%s1 + $0x64] sm:$0xf]
  %v50 = vld [vmem:[%s1 + $0x68] sm:$0xf]
  %v51 = vld [vmem:[%s1 + $0x6c] sm:$0xf]
  %v52 = vld [vmem:[%s1 + $0x70] sm:$0xf]
  %v53 = vld [vmem:[%s1 + $0x74] sm:$0xf]
  %v54 = vld [vmem:[%s1 + $0x78] sm:$0xf]
  %v55 = vld [vmem:[%s1 + $0x7c] sm:$0xf]
  %v56 = vld [vmem:[%s1 + $0x80] sm:$0xf]
  %v57 = vld [vmem:[%s1 + $0x84] sm:$0xf]
  %v58 = vld [vmem:[%s1 + $0x88] sm:$0xf]
  %v59 = vld [vmem:[%s1 + $0x8c] sm:$0xf]
  %v60 = vld [vmem:[%s1 + $0x90] sm:$0xf]
  %v61 = vld [vmem:[%s1 + $0x94] sm:$0xf]
  %v62 = vld [vmem:[%s1 + $0x98] sm:$0xf]
  %v63 = vld [vmem:[%s1 + $0x9c] sm:$0xf]
  %v64 = vld [vmem:[%s1 + $0xa0] sm:$0xf]
  %v65 = vld [vmem:[%s1 + $0xa4] sm:$0xf]
  %v66 = vld [vmem:[%s1 + $0xa8] sm:$0xf]
  %v67 = vld [vmem:[%s1 + $0xac] sm:$0xf]
  %v68 = vld [vmem:[%s1 + $0xb0] sm:$0xf]
  %v69 = vld [vmem:[%s1 + $0xb4] sm:$0xf]
  %v70 = vld [vmem:[%s1 + $0xb8] sm:$0xf]
  %v71 = vld [vmem:[%s1 + $0xbc] sm:$0xf]
  %v72 = vld [vmem:[%s1 + $0xc0] sm:$0xf]
  %v73 = vld [vmem:[%s1 + $0xc4] sm:$0xf]
  %v74 = vld [vmem:[%s1 + $0xc8] sm:$0xf]
  %v75 = vld [vmem:[%s1 + $0xcc] sm:$0xf]
  %v76 = vld [vmem:[%s1 + $0xd0] sm:$0xf]
  %v77 = vld [vmem:[%s1 + $0xd4] sm:$0xf]
  %v78 = vld [vmem:[%s1 + $0xd8] sm:$0xf]
  %v79 = vld [vmem:[%s1 + $0xdc] sm:$0xf]
  %v80 = vld [vmem:[%s1 + $0xe0] sm:$0xf]
  %v81 = vld [vmem:[%s1 + $0xe4] sm:$0xf]
  %v82 = vld [vmem:[%s1 + $0xe8] sm:$0xf]
  %v83 = vld [vmem:[%s1 + $0xec] sm:$0xf]
  %v84 = vld [vmem:[%s1 + $0xf0] sm:$0xf]
  %v85 = vld [vmem:[%s1 + $0xf4] sm:$0xf]
  %v86 = vld [vmem:[%s1 + $0xf8] sm:$0xf]
  %v87 = vld [vmem:[%s1 + $0xfc] sm:$0xf]
  %v88 = vld [vmem:[%s1 + $0x100] sm:$0xf]
  %v89 = vld [vmem:[%s1 + $0x104] sm:$0xf]
  %v90 = vld [vmem:[%s1 + $0x108] sm:$0xf]
  %v91 = vld [vmem:[%s1 + $0x10c] sm:$0xf]
  %v92 = vld [vmem:[%s1 + $0x110] sm:$0xf]
  %v93 = vld [vmem:[%s1 + $0x114] sm:$0xf]
  %v94 = vld [vmem:[%s1 + $0x118] sm:$0xf]
  %v95 = vld [vmem:[%s1 + $0x11c] sm:$0xf]
  %v96 = vld [vmem:[%s1 + $0x120] sm:$0xf]
  %v97 = vld [vmem:[%s1 + $0x124] sm:$0xf]
  %v98 = vld [vmem:[%s1 + $0x128] sm:$0xf]
  %v99 = vld [vmem:[%s1 + $0x12c] sm:$0xf]
  %v100 = vld [vmem:[%s1 + $0x130] sm:$0xf]
  %v101 = vld [vmem:[%s1 + $0x134] sm:$0xf]
  %v102 = vld [vmem:[%s1 + $0x138] sm:$0xf]
  %v103 = vld [vmem:[%s1 + $0x13c] sm:$0xf]
  %v104 = vld [vmem:[%s1 + $0x140] sm:$0xf]
  %v105 = vld [vmem:[%s1 + $0x144] sm:$0xf]
  %v106 = vld [vmem:[%s1 + $0x148] sm:$0xf]
  %v107 = vld [vmem:[%s1 + $0x14c] sm:$0xf]
  %v108 = vld [vmem:[%s1 + $0x150] sm:$0xf]
  %v109 = vld [vmem:[%s1 + $0x154] sm:$0xf]
  %v110 = vld [vmem:[%s1 + $0x158] sm:$0xf]
  %v111 = vld [vmem:[%s1 + $0x15c] sm:$0xf]
  %v112 = vld [vmem:[%s1 + $0x160] sm:$0xf]
  %v113 = vld [vmem:[%s1 + $0x164] sm:$0xf]
  %v114 = vld [vmem:[%s1 + $0x168] sm:$0xf]
  %v115 = vld [vmem:[%s1 + $0x16c] sm:$0xf]
  %v116 = vld [vmem:[%s1 + $0x170] sm:$0xf]
  %v117 = vld [vmem:[%s1 + $0x174] sm:$0xf]
  %v118 = vld [vmem:[%s1 + $0x178] sm:$0xf]
  %v119 = vld [vmem:[%s1 + $0x17c] sm:$0xf]
  %v120 = vld [vmem:[%s1 + $0x180] sm:$0xf]
  %v121 = vld [vmem:[%s1 + $0x184] sm:$0xf]
  %v122 = vld [vmem:[%s1 + $0x188] sm:$0xf]
  %v123 = vld [vmem:[%s1 + $0x18c] sm:$0xf]
  %v124 = vld [vmem:[%s1 + $0x190] sm:$0xf]
  %v125 = vld [vmem:[%s1 + $0x194] sm:$0xf]
  %v126 = vld [vmem:[%s1 + $0x198] sm:$0xf]
  %v127 = vld [vmem:[%s1 + $0x19c] sm:$0xf]
  %v128 = vld [vmem:[%s1 + $0x1a0] sm:$0xf]
  %v129 = vld [vmem:[%s1 + $0x1a4] sm:$0xf]
  %v130 = vld [vmem:[%s1 + $0x1a8] sm:$0xf]
  %v131 = vld [vmem:[%s1 + $0x1ac] sm:$0xf]
  %v132 = vld [vmem:[%s1 + $0x1b0] sm:$0xf]
  %v133 = vld [vmem:[%s1 + $0x1b4] sm:$0xf]
  %v134 = vld [vmem:[%s1 + $0x1b8] sm:$0xf]
  %v135 = vld [vmem:[%s1 + $0x1bc] sm:$0xf]
  %v136 = vld [vmem:[%s1 + $0x1c0] sm:$0xf]
  %v137 = vld [vmem:[%s1 + $0x1c4] sm:$0xf]
  %v138 = vld [vmem:[%s1 + $0x1c8] sm:$0xf]
  %v139 = vld [vmem:[%s1 + $0x1cc] sm:$0xf]
  %v140 = vld [vmem:[%s1 + $0x1d0] sm:$0xf]
  %v141 = vld [vmem:[%s1 + $0x1d4] sm:$0xf]
  %v142 = vld [vmem:[%s1 + $0x1d8] sm:$0xf]
  %v143 = vld [vmem:[%s1 + $0x1dc] sm:$0xf]
  %v144 = vld [vmem:[%s1 + $0x1e0] sm:$0xf]
  %v145 = vld [vmem:[%s1 + $0x1e4] sm:$0xf]
  %v146 = vld [vmem:[%s1 + $0x1e8] sm:$0xf]
  %v147 = vld [vmem:[%s1 + $0x1ec] sm:$0xf]
  %v148 = vld [vmem:[%s1 + $0x1f0] sm:$0xf]
  %v149 = vld [vmem:[%s1 + $0x1f4] sm:$0xf]
  %v150 = vld [vmem:[%s1 + $0x1f8] sm:$0xf]
  %v151 = vld [vmem:[%s1 + $0x1fc] sm:$0xf]
  %v152 = vld [vmem:[%s1 + $0x200] sm:$0xf]
  %v153 = vld [vmem:[%s1 + $0x204] sm:$0xf]
  %v154 = vld [vmem:[%s1 + $0x208] sm:$0xf]
  %v155 = vld [vmem:[%s1 + $0x20c] sm:$0xf]
  %v156 = vld [vmem:[%s1 + $0x210] sm:$0xf]
  %v157 = vld [vmem:[%s1 + $0x214] sm:$0xf]
  %v158 = vld [vmem:[%s1 + $0x218] sm:$0xf]
  %v159 = vld [vmem:[%s1 + $0x21c] sm:$0xf]
  %v160 = vld [vmem:[%s1 + $0x220] sm:$0xf]
  %v161 = vld [vmem:[%s1 + $0x224] sm:$0xf]
  %v162 = vld [vmem:[%s1 + $0x228] sm:$0xf]
  %v163 = vld [vmem:[%s1 + $0x22c] sm:$0xf]
  %v164 = vld [vmem:[%s1 + $0x230] sm:$0xf]
  %v165 = vld [vmem:[%s1 + $0x234] sm:$0xf]
  %v166 = vld [vmem:[%s1 + $0x238] sm:$0xf]
  %v167 = vld [vmem:[%s1 + $0x23c] sm:$0xf]
  %v168 = vld [vmem:[%s1 + $0x240] sm:$0xf]
  %v169 = vld [vmem:[%s1 + $0x244] sm:$0xf]
  %v170 = vld [vmem:[%s1 + $0x248] sm:$0xf]
  %v171 = vld [vmem:[%s1 + $0x24c] sm:$0xf]
  %v172 = vld [vmem:[%s1 + $0x250] sm:$0xf]
  %v173 = vld [vmem:[%s1 + $0x254] sm:$0xf]
  %v174 = vld [vmem:[%s1 + $0x258] sm:$0xf]
  %v175 = vld [vmem:[%s1 + $0x25c] sm:$0xf]
  %v176 = vld [vmem:[%s1 + $0x260] sm:$0xf]
  %v177 = vld [vmem:[%s1 + $0x264] sm:$0xf]
  %v178 = vld [vmem:[%s1 + $0x268] sm:$0xf]
  %v179 = vld [vmem:[%s1 + $0x26c] sm:$0xf]
  %v180 = vld [vmem:[%s1 + $0x270] sm:$0xf]
  %v181 = vld [vmem:[%s1 + $0x274] sm:$0xf]
  %v182 = vld [vmem:[%s1 + $0x278] sm:$0xf]
  %v183 = vld [vmem:[%s1 + $0x27c] sm:$0xf]
  %v184 = vld [vmem:[%s1 + $0x280] sm:$0xf]
  %v185 = vld [vmem:[%s1 + $0x284] sm:$0xf]
  %v186 = vld [vmem:[%s1 + $0x288] sm:$0xf]
  %v187 = vld [vmem:[%s1 + $0x28c] sm:$0xf]
  %v188 = vld [vmem:[%s1 + $0x290] sm:$0xf]
  %v189 = vld [vmem:[%s1 + $0x294] sm:$0xf]
  %v190 = vld [vmem:[%s1 + $0x298] sm:$0xf]
  %v191 = vld [vmem:[%s1 + $0x29c] sm:$0xf]
  %v192 = vld [vmem:[%s1 + $0x2a0] sm:$0xf]
  %v193 = vld [vmem:[%s1 + $0x2a4] sm:$0xf]
  %v194 = vld [vmem:[%s1 + $0x2a8] sm:$0xf]
  %v195 = vld [vmem:[%s1 + $0x2ac] sm:$0x3]
  %v202 = vunpack.c.l.b16 %v18
  %v203 = vunpack.c.h.b16 %v18
  %v204 = vunpack.c.l.b16 %v19
  %v205 = vunpack.c.h.b16 %v19
  %v206 = vunpack.c.l.b16 %v20
  %v207 = vunpack.c.h.b16 %v20
  %v208 = vunpack.c.l.b16 %v21
  %v209 = vunpack.c.h.b16 %v21
  %v210 = vunpack.c.l.b16 %v22
  %v211 = vunpack.c.h.b16 %v22
  %v212 = vunpack.c.l.b16 %v23
  %v213 = vpack.c.b16 %v202, %v202
  %v214 = vpack.c.b16 %v203, %v203
  %v215 = vpack.c.b16 %v204, %v204
  %v216 = vpack.c.b16 %v205, %v205
  %v217 = vpack.c.b16 %v206, %v206
  %v218 = vpack.c.b16 %v207, %v207
  %v219 = vpack.c.b16 %v208, %v208
  %v220 = vpack.c.b16 %v209, %v209
  %v221 = vpack.c.b16 %v210, %v210
  %v222 = vpack.c.b16 %v211, %v211
  %v223 = vpack.c.b16 %v212, %v212
  %v406 = vunpack.c.l.b16 %v24
  %v407 = vunpack.c.l.b16 %v25
  %v408 = vunpack.c.l.b16 %v26
  %v409 = vunpack.c.l.b16 %v27
  %v410 = vunpack.c.l.b16 %v28
  %v411 = vunpack.c.l.b16 %v29
  %v412 = vunpack.c.l.b16 %v30
  %v413 = vunpack.c.l.b16 %v31
  %v414 = vunpack.c.l.b16 %v32
  %v415 = vunpack.c.l.b16 %v33
  %v416 = vunpack.c.l.b16 %v34
  %v417 = vunpack.c.l.b16 %v35
  %v418 = vunpack.c.l.b16 %v36
  %v419 = vunpack.c.l.b16 %v37
  %v420 = vunpack.c.l.b16 %v38
  %v421 = vunpack.c.l.b16 %v39
  %v422 = vunpack.c.l.b16 %v40
  %v423 = vunpack.c.l.b16 %v41
  %v424 = vunpack.c.l.b16 %v42
  %v425 = vunpack.c.l.b16 %v43
  %v426 = vunpack.c.l.b16 %v44
  %v427 = vunpack.c.l.b16 %v45
  %v428 = vunpack.c.l.b16 %v46
  %v429 = vunpack.c.l.b16 %v47
  %v430 = vunpack.c.l.b16 %v48
  %v431 = vunpack.c.l.b16 %v49
  %v432 = vunpack.c.l.b16 %v50
  %v433 = vunpack.c.l.b16 %v51
  %v434 = vunpack.c.l.b16 %v52
  %v435 = vunpack.c.l.b16 %v53
  %v436 = vunpack.c.l.b16 %v54
  %v437 = vunpack.c.l.b16 %v55
  %v438 = vunpack.c.l.b16 %v56
  %v439 = vunpack.c.l.b16 %v57
  %v440 = vunpack.c.l.b16 %v58
  %v441 = vunpack.c.l.b16 %v59
  %v442 = vunpack.c.l.b16 %v60
  %v443 = vunpack.c.l.b16 %v61
  %v444 = vunpack.c.l.b16 %v62
  %v445 = vunpack.c.l.b16 %v63
  %v446 = vunpack.c.l.b16 %v64
  %v447 = vunpack.c.l.b16 %v65
  %v448 = vunpack.c.l.b16 %v66
  %v449 = vunpack.c.l.b16 %v67
  %v450 = vunpack.c.l.b16 %v68
  %v451 = vunpack.c.l.b16 %v69
  %v452 = vunpack.c.l.b16 %v70
  %v453 = vunpack.c.l.b16 %v71
  %v454 = vunpack.c.l.b16 %v72
  %v455 = vunpack.c.l.b16 %v73
  %v456 = vunpack.c.l.b16 %v74
  %v457 = vunpack.c.l.b16 %v75
  %v458 = vunpack.c.l.b16 %v76
  %v459 = vunpack.c.l.b16 %v77
  %v460 = vunpack.c.l.b16 %v78
  %v461 = vunpack.c.l.b16 %v79
  %v462 = vunpack.c.l.b16 %v80
  %v463 = vunpack.c.l.b16 %v81
  %v464 = vunpack.c.l.b16 %v82
  %v465 = vunpack.c.l.b16 %v83
  %v466 = vunpack.c.l.b16 %v84
  %v467 = vunpack.c.l.b16 %v85
  %v468 = vunpack.c.l.b16 %v86
  %v469 = vunpack.c.l.b16 %v87
  %v470 = vunpack.c.l.b16 %v88
  %v471 = vunpack.c.l.b16 %v89
  %v472 = vunpack.c.l.b16 %v90
  %v473 = vunpack.c.l.b16 %v91
  %v474 = vunpack.c.l.b16 %v92
  %v475 = vunpack.c.l.b16 %v93
  %v476 = vunpack.c.l.b16 %v94
  %v477 = vunpack.c.l.b16 %v95
  %v478 = vunpack.c.l.b16 %v96
  %v479 = vunpack.c.l.b16 %v97
  %v480 = vunpack.c.l.b16 %v98
  %v481 = vunpack.c.l.b16 %v99
  %v482 = vunpack.c.l.b16 %v100
  %v483 = vunpack.c.l.b16 %v101
  %v484 = vunpack.c.l.b16 %v102
  %v485 = vunpack.c.l.b16 %v103
  %v486 = vunpack.c.l.b16 %v104
  %v487 = vunpack.c.l.b16 %v105
  %v488 = vunpack.c.l.b16 %v106
  %v489 = vunpack.c.l.b16 %v107
  %v490 = vunpack.c.l.b16 %v108
  %v491 = vunpack.c.l.b16 %v109
  %v492 = vunpack.c.l.b16 %v110
  %v493 = vunpack.c.l.b16 %v111
  %v494 = vunpack.c.l.b16 %v112
  %v495 = vunpack.c.l.b16 %v113
  %v496 = vunpack.c.l.b16 %v114
  %v497 = vunpack.c.l.b16 %v115
  %v498 = vunpack.c.l.b16 %v116
  %v499 = vunpack.c.l.b16 %v117
  %v500 = vunpack.c.l.b16 %v118
  %v501 = vunpack.c.l.b16 %v119
  %v502 = vunpack.c.l.b16 %v120
  %v503 = vunpack.c.l.b16 %v121
  %v504 = vunpack.c.l.b16 %v122
  %v505 = vunpack.c.l.b16 %v123
  %v506 = vunpack.c.l.b16 %v124
  %v507 = vunpack.c.l.b16 %v125
  %v508 = vunpack.c.l.b16 %v126
  %v509 = vunpack.c.l.b16 %v127
  %v510 = vunpack.c.l.b16 %v128
  %v511 = vunpack.c.l.b16 %v129
  %v512 = vunpack.c.l.b16 %v130
  %v513 = vunpack.c.l.b16 %v131
  %v514 = vunpack.c.l.b16 %v132
  %v515 = vunpack.c.l.b16 %v133
  %v516 = vunpack.c.l.b16 %v134
  %v517 = vunpack.c.l.b16 %v135
  %v518 = vunpack.c.l.b16 %v136
  %v519 = vunpack.c.l.b16 %v137
  %v520 = vunpack.c.l.b16 %v138
  %v521 = vunpack.c.l.b16 %v139
  %v522 = vunpack.c.l.b16 %v140
  %v523 = vunpack.c.l.b16 %v141
  %v524 = vunpack.c.l.b16 %v142
  %v525 = vunpack.c.l.b16 %v143
  %v526 = vunpack.c.l.b16 %v144
  %v527 = vunpack.c.l.b16 %v145
  %v528 = vunpack.c.l.b16 %v146
  %v529 = vunpack.c.l.b16 %v147
  %v530 = vunpack.c.l.b16 %v148
  %v531 = vunpack.c.l.b16 %v149
  %v532 = vunpack.c.l.b16 %v150
  %v533 = vunpack.c.l.b16 %v151
  %v534 = vunpack.c.l.b16 %v152
  %v535 = vunpack.c.l.b16 %v153
  %v536 = vunpack.c.l.b16 %v154
  %v537 = vunpack.c.l.b16 %v155
  %v538 = vunpack.c.l.b16 %v156
  %v539 = vunpack.c.l.b16 %v157
  %v540 = vunpack.c.l.b16 %v158
  %v541 = vunpack.c.l.b16 %v159
  %v542 = vunpack.c.l.b16 %v160
  %v543 = vunpack.c.l.b16 %v161
  %v544 = vunpack.c.l.b16 %v162
  %v545 = vunpack.c.l.b16 %v163
  %v546 = vunpack.c.l.b16 %v164
  %v547 = vunpack.c.l.b16 %v165
  %v548 = vunpack.c.l.b16 %v166
  %v549 = vunpack.c.l.b16 %v167
  %v550 = vunpack.c.l.b16 %v168
  %v551 = vunpack.c.l.b16 %v169
  %v552 = vunpack.c.l.b16 %v170
  %v553 = vunpack.c.l.b16 %v171
  %v554 = vunpack.c.l.b16 %v172
  %v555 = vunpack.c.l.b16 %v173
  %v556 = vunpack.c.l.b16 %v174
  %v557 = vunpack.c.l.b16 %v175
  %v558 = vunpack.c.l.b16 %v176
  %v559 = vunpack.c.l.b16 %v177
  %v560 = vunpack.c.l.b16 %v178
  %v561 = vunpack.c.l.b16 %v179
  %v562 = vunpack.c.l.b16 %v180
  %v563 = vunpack.c.l.b16 %v181
  %v564 = vunpack.c.l.b16 %v182
  %v565 = vunpack.c.l.b16 %v183
  %v566 = vunpack.c.l.b16 %v184
  %v567 = vunpack.c.l.b16 %v185
  %v568 = vunpack.c.l.b16 %v186
  %v569 = vunpack.c.l.b16 %v187
  %v570 = vunpack.c.l.b16 %v188
  %v571 = vunpack.c.l.b16 %v189
  %v572 = vunpack.c.l.b16 %v190
  %v573 = vunpack.c.l.b16 %v191
  %v574 = vunpack.c.l.b16 %v192
  %v575 = vunpack.c.l.b16 %v193
  %v576 = vunpack.c.l.b16 %v194
  %v577 = vunpack.c.l.b16 %v195
  %v578 = vpack.c.b16 %v407, %v406
  %v579 = vpack.c.b16 %v409, %v408
  %v580 = vpack.c.b16 %v411, %v410
  %v581 = vpack.c.b16 %v413, %v412
  %v582 = vpack.c.b16 %v415, %v414
  %v583 = vpack.c.b16 %v417, %v416
  %v584 = vpack.c.b16 %v419, %v418
  %v585 = vpack.c.b16 %v421, %v420
  %v586 = vpack.c.b16 %v423, %v422
  %v587 = vpack.c.b16 %v425, %v424
  %v588 = vpack.c.b16 %v427, %v426
  %v589 = vpack.c.b16 %v429, %v428
  %v590 = vpack.c.b16 %v431, %v430
  %v591 = vpack.c.b16 %v433, %v432
  %v592 = vpack.c.b16 %v435, %v434
  %v593 = vpack.c.b16 %v437, %v436
  %v594 = vpack.c.b16 %v439, %v438
  %v595 = vpack.c.b16 %v441, %v440
  %v596 = vpack.c.b16 %v443, %v442
  %v597 = vpack.c.b16 %v445, %v444
  %v598 = vpack.c.b16 %v447, %v446
  %v599 = vpack.c.b16 %v449, %v448
  %v600 = vpack.c.b16 %v451, %v450
  %v601 = vpack.c.b16 %v453, %v452
  %v602 = vpack.c.b16 %v455, %v454
  %v603 = vpack.c.b16 %v457, %v456
  %v604 = vpack.c.b16 %v459, %v458
  %v605 = vpack.c.b16 %v461, %v460
  %v606 = vpack.c.b16 %v463, %v462
  %v607 = vpack.c.b16 %v465, %v464
  %v608 = vpack.c.b16 %v467, %v466
  %v609 = vpack.c.b16 %v469, %v468
  %v610 = vpack.c.b16 %v471, %v470
  %v611 = vpack.c.b16 %v473, %v472
  %v612 = vpack.c.b16 %v475, %v474
  %v613 = vpack.c.b16 %v477, %v476
  %v614 = vpack.c.b16 %v479, %v478
  %v615 = vpack.c.b16 %v481, %v480
  %v616 = vpack.c.b16 %v483, %v482
  %v617 = vpack.c.b16 %v485, %v484
  %v618 = vpack.c.b16 %v487, %v486
  %v619 = vpack.c.b16 %v489, %v488
  %v620 = vpack.c.b16 %v491, %v490
  %v621 = vpack.c.b16 %v493, %v492
  %v622 = vpack.c.b16 %v495, %v494
  %v623 = vpack.c.b16 %v497, %v496
  %v624 = vpack.c.b16 %v499, %v498
  %v625 = vpack.c.b16 %v501, %v500
  %v626 = vpack.c.b16 %v503, %v502
  %v627 = vpack.c.b16 %v505, %v504
  %v628 = vpack.c.b16 %v507, %v506
  %v629 = vpack.c.b16 %v509, %v508
  %v630 = vpack.c.b16 %v511, %v510
  %v631 = vpack.c.b16 %v513, %v512
  %v632 = vpack.c.b16 %v515, %v514
  %v633 = vpack.c.b16 %v517, %v516
  %v634 = vpack.c.b16 %v519, %v518
  %v635 = vpack.c.b16 %v521, %v520
  %v636 = vpack.c.b16 %v523, %v522
  %v637 = vpack.c.b16 %v525, %v524
  %v638 = vpack.c.b16 %v527, %v526
  %v639 = vpack.c.b16 %v529, %v528
  %v640 = vpack.c.b16 %v531, %v530
  %v641 = vpack.c.b16 %v533, %v532
  %v642 = vpack.c.b16 %v535, %v534
  %v643 = vpack.c.b16 %v537, %v536
  %v644 = vpack.c.b16 %v539, %v538
  %v645 = vpack.c.b16 %v541, %v540
  %v646 = vpack.c.b16 %v543, %v542
  %v647 = vpack.c.b16 %v545, %v544
  %v648 = vpack.c.b16 %v547, %v546
  %v649 = vpack.c.b16 %v549, %v548
  %v650 = vpack.c.b16 %v551, %v550
  %v651 = vpack.c.b16 %v553, %v552
  %v652 = vpack.c.b16 %v555, %v554
  %v653 = vpack.c.b16 %v557, %v556
  %v654 = vpack.c.b16 %v559, %v558
  %v655 = vpack.c.b16 %v561, %v560
  %v656 = vpack.c.b16 %v563, %v562
  %v657 = vpack.c.b16 %v565, %v564
  %v658 = vpack.c.b16 %v567, %v566
  %v659 = vpack.c.b16 %v569, %v568
  %v660 = vpack.c.b16 %v571, %v570
  %v661 = vpack.c.b16 %v573, %v572
  %v662 = vpack.c.b16 %v575, %v574
  %v663 = vpack.c.b16 %v577, %v576
  %vm749 = vcmask 752640
  %v751 = vsel %vm749, %v223, 0
  %vm753 = vcmask 1045504
  %v755 = vsel %vm753, %v663, 0
  %757 = vmatprep.subr.bf16.mxu0 0
  %758 = vmatpush1.bf16.msra.mxu0 %v578
  %759 = vmatprep.subr.bf16.mxu0 0
  %760 = vmatpush1.bf16.msra.mxu0 %v579
  %761 = vmatprep.subr.bf16.mxu0 0
  %762 = vmatpush1.bf16.msra.mxu0 %v580
  %763 = vmatprep.subr.bf16.mxu0 0
  %764 = vmatpush1.bf16.msra.mxu0 %v581
  %765 = vmatprep.subr.bf16.mxu0 0
  %766 = vmatpush1.bf16.msra.mxu0 %v582
  %767 = vmatprep.subr.bf16.mxu0 0
  %768 = vmatpush1.bf16.msra.mxu0 %v583
  %769 = vmatprep.subr.bf16.mxu0 0
  %770 = vmatpush1.bf16.msra.mxu0 %v584
  %771 = vmatprep.subr.bf16.mxu0 0
  %772 = vmatpush1.bf16.msra.mxu0 %v585
  %773 = vmatprep.subr.bf16.mxu0 0
  %774 = vmatpush1.bf16.msra.mxu0 %v586
  %775 = vmatprep.subr.bf16.mxu0 0
  %776 = vmatpush1.bf16.msra.mxu0 %v587
  %777 = vmatprep.subr.bf16.mxu0 0
  %778 = vmatpush1.bf16.msra.mxu0 %v588
  %779 = vmatprep.subr.bf16.mxu0 0
  %780 = vmatpush1.bf16.msra.mxu0 %v589
  %781 = vmatprep.subr.bf16.mxu0 0
  %782 = vmatpush1.bf16.msra.mxu0 %v590
  %783 = vmatprep.subr.bf16.mxu0 0
  %784 = vmatpush1.bf16.msra.mxu0 %v591
  %785 = vmatprep.subr.bf16.mxu0 0
  %786 = vmatpush1.bf16.msra.mxu0 %v592
  %787 = vmatprep.subr.bf16.mxu0 0
  %788 = vmatpush1.bf16.msra.mxu0 %v593
  %789 = vmatprep.mubr.bf16.mxu0 %v214
  %790 = vmatmul.mubr.bf16.gmra.mrb[0].mxu0 %v213
  %v791 = vpop.f32.mrb[0].mxu0
  %v792 = vadd.f32 0.0, %v791
  %v793 = vpop.f32.mrb[0].mxu0
  %v794 = vpop.f32.mrb[0].mxu0
  %v795 = vpop.f32.mrb[0].mxu0
  %796 = vdwg.mxu0
  %797 = vmatprep.subr.bf16.mxu0 0
  %798 = vmatpush1.bf16.msra.mxu0 %v594
  %799 = vmatprep.subr.bf16.mxu0 0
  %800 = vmatpush1.bf16.msra.mxu0 %v595
  %801 = vmatprep.subr.bf16.mxu0 0
  %802 = vmatpush1.bf16.msra.mxu0 %v596
  %803 = vmatprep.subr.bf16.mxu0 0
  %804 = vmatpush1.bf16.msra.mxu0 %v597
  %805 = vmatprep.subr.bf16.mxu0 0
  %806 = vmatpush1.bf16.msra.mxu0 %v598
  %807 = vmatprep.subr.bf16.mxu0 0
  %808 = vmatpush1.bf16.msra.mxu0 %v599
  %809 = vmatprep.subr.bf16.mxu0 0
  %810 = vmatpush1.bf16.msra.mxu0 %v600
  %811 = vmatprep.subr.bf16.mxu0 0
  %812 = vmatpush1.bf16.msra.mxu0 %v601
  %813 = vmatprep.subr.bf16.mxu0 0
  %814 = vmatpush1.bf16.msra.mxu0 %v602
  %815 = vmatprep.subr.bf16.mxu0 0
  %816 = vmatpush1.bf16.msra.mxu0 %v603
  %817 = vmatprep.subr.bf16.mxu0 0
  %818 = vmatpush1.bf16.msra.mxu0 %v604
  %819 = vmatprep.subr.bf16.mxu0 0
  %820 = vmatpush1.bf16.msra.mxu0 %v605
  %821 = vmatprep.subr.bf16.mxu0 0
  %822 = vmatpush1.bf16.msra.mxu0 %v606
  %823 = vmatprep.subr.bf16.mxu0 0
  %824 = vmatpush1.bf16.msra.mxu0 %v607
  %825 = vmatprep.subr.bf16.mxu0 0
  %826 = vmatpush1.bf16.msra.mxu0 %v608
  %827 = vmatprep.subr.bf16.mxu0 0
  %828 = vmatpush1.bf16.msra.mxu0 %v609
  %829 = vmatprep.mubr.bf16.mxu0 %v216
  %830 = vmatmul.mubr.bf16.gmra.mrb[0].mxu0 %v215
  %v831 = vpop.f32.mrb[0].mxu0
  %v832 = vadd.f32 %v792, %v831
  %v833 = vpop.f32.mrb[0].mxu0
  %v834 = vpop.f32.mrb[0].mxu0
  %v835 = vpop.f32.mrb[0].mxu0
  %836 = vdwg.mxu0
  %837 = vmatprep.subr.bf16.mxu0 0
  %838 = vmatpush1.bf16.msra.mxu0 %v610
  %839 = vmatprep.subr.bf16.mxu0 0
  %840 = vmatpush1.bf16.msra.mxu0 %v611
  %841 = vmatprep.subr.bf16.mxu0 0
  %842 = vmatpush1.bf16.msra.mxu0 %v612
  %843 = vmatprep.subr.bf16.mxu0 0
  %844 = vmatpush1.bf16.msra.mxu0 %v613
  %845 = vmatprep.subr.bf16.mxu0 0
  %846 = vmatpush1.bf16.msra.mxu0 %v614
  %847 = vmatprep.subr.bf16.mxu0 0
  %848 = vmatpush1.bf16.msra.mxu0 %v615
  %849 = vmatprep.subr.bf16.mxu0 0
  %850 = vmatpush1.bf16.msra.mxu0 %v616
  %851 = vmatprep.subr.bf16.mxu0 0
  %852 = vmatpush1.bf16.msra.mxu0 %v617
  %853 = vmatprep.subr.bf16.mxu0 0
  %854 = vmatpush1.bf16.msra.mxu0 %v618
  %855 = vmatprep.subr.bf16.mxu0 0
  %856 = vmatpush1.bf16.msra.mxu0 %v619
  %857 = vmatprep.subr.bf16.mxu0 0
  %858 = vmatpush1.bf16.msra.mxu0 %v620
  %859 = vmatprep.subr.bf16.mxu0 0
  %860 = vmatpush1.bf16.msra.mxu0 %v621
  %861 = vmatprep.subr.bf16.mxu0 0
  %862 = vmatpush1.bf16.msra.mxu0 %v622
  %863 = vmatprep.subr.bf16.mxu0 0
  %864 = vmatpush1.bf16.msra.mxu0 %v623
  %865 = vmatprep.subr.bf16.mxu0 0
  %866 = vmatpush1.bf16.msra.mxu0 %v624
  %867 = vmatprep.subr.bf16.mxu0 0
  %868 = vmatpush1.bf16.msra.mxu0 %v625
  %869 = vmatprep.mubr.bf16.mxu0 %v218
  %870 = vmatmul.mubr.bf16.gmra.mrb[0].mxu0 %v217
  %v871 = vpop.f32.mrb[0].mxu0
  %v872 = vadd.f32 %v832, %v871
  %v873 = vpop.f32.mrb[0].mxu0
  %v874 = vpop.f32.mrb[0].mxu0
  %v875 = vpop.f32.mrb[0].mxu0
  %876 = vdwg.mxu0
  %877 = vmatprep.subr.bf16.mxu0 0
  %878 = vmatpush1.bf16.msra.mxu0 %v626
  %879 = vmatprep.subr.bf16.mxu0 0
  %880 = vmatpush1.bf16.msra.mxu0 %v627
  %881 = vmatprep.subr.bf16.mxu0 0
  %882 = vmatpush1.bf16.msra.mxu0 %v628
  %883 = vmatprep.subr.bf16.mxu0 0
  %884 = vmatpush1.bf16.msra.mxu0 %v629
  %885 = vmatprep.subr.bf16.mxu0 0
  %886 = vmatpush1.bf16.msra.mxu0 %v630
  %887 = vmatprep.subr.bf16.mxu0 0
  %888 = vmatpush1.bf16.msra.mxu0 %v631
  %889 = vmatprep.subr.bf16.mxu0 0
  %890 = vmatpush1.bf16.msra.mxu0 %v632
  %891 = vmatprep.subr.bf16.mxu0 0
  %892 = vmatpush1.bf16.msra.mxu0 %v633
  %893 = vmatprep.subr.bf16.mxu0 0
  %894 = vmatpush1.bf16.msra.mxu0 %v634
  %895 = vmatprep.subr.bf16.mxu0 0
  %896 = vmatpush1.bf16.msra.mxu0 %v635
  %897 = vmatprep.subr.bf16.mxu0 0
  %898 = vmatpush1.bf16.msra.mxu0 %v636
  %899 = vmatprep.subr.bf16.mxu0 0
  %900 = vmatpush1.bf16.msra.mxu0 %v637
  %901 = vmatprep.subr.bf16.mxu0 0
  %902 = vmatpush1.bf16.msra.mxu0 %v638
  %903 = vmatprep.subr.bf16.mxu0 0
  %904 = vmatpush1.bf16.msra.mxu0 %v639
  %905 = vmatprep.subr.bf16.mxu0 0
  %906 = vmatpush1.bf16.msra.mxu0 %v640
  %907 = vmatprep.subr.bf16.mxu0 0
  %908 = vmatpush1.bf16.msra.mxu0 %v641
  %909 = vmatprep.mubr.bf16.mxu0 %v220
  %910 = vmatmul.mubr.bf16.gmra.mrb[0].mxu0 %v219
  %v911 = vpop.f32.mrb[0].mxu0
  %v912 = vadd.f32 %v872, %v911
  %v913 = vpop.f32.mrb[0].mxu0
  %v914 = vpop.f32.mrb[0].mxu0
  %v915 = vpop.f32.mrb[0].mxu0
  %916 = vdwg.mxu0
  %917 = vmatprep.subr.bf16.mxu0 0
  %918 = vmatpush1.bf16.msra.mxu0 %v642
  %919 = vmatprep.subr.bf16.mxu0 0
  %920 = vmatpush1.bf16.msra.mxu0 %v643
  %921 = vmatprep.subr.bf16.mxu0 0
  %922 = vmatpush1.bf16.msra.mxu0 %v644
  %923 = vmatprep.subr.bf16.mxu0 0
  %924 = vmatpush1.bf16.msra.mxu0 %v645
  %925 = vmatprep.subr.bf16.mxu0 0
  %926 = vmatpush1.bf16.msra.mxu0 %v646
  %927 = vmatprep.subr.bf16.mxu0 0
  %928 = vmatpush1.bf16.msra.mxu0 %v647
  %929 = vmatprep.subr.bf16.mxu0 0
  %930 = vmatpush1.bf16.msra.mxu0 %v648
  %931 = vmatprep.subr.bf16.mxu0 0
  %932 = vmatpush1.bf16.msra.mxu0 %v649
  %933 = vmatprep.subr.bf16.mxu0 0
  %934 = vmatpush1.bf16.msra.mxu0 %v650
  %935 = vmatprep.subr.bf16.mxu0 0
  %936 = vmatpush1.bf16.msra.mxu0 %v651
  %937 = vmatprep.subr.bf16.mxu0 0
  %938 = vmatpush1.bf16.msra.mxu0 %v652
  %939 = vmatprep.subr.bf16.mxu0 0
  %940 = vmatpush1.bf16.msra.mxu0 %v653
  %941 = vmatprep.subr.bf16.mxu0 0
  %942 = vmatpush1.bf16.msra.mxu0 %v654
  %943 = vmatprep.subr.bf16.mxu0 0
  %944 = vmatpush1.bf16.msra.mxu0 %v655
  %945 = vmatprep.subr.bf16.mxu0 0
  %946 = vmatpush1.bf16.msra.mxu0 %v656
  %947 = vmatprep.subr.bf16.mxu0 0
  %948 = vmatpush1.bf16.msra.mxu0 %v657
  %949 = vmatprep.mubr.bf16.mxu0 %v222
  %950 = vmatmul.mubr.bf16.gmra.mrb[0].mxu0 %v221
  %v951 = vpop.f32.mrb[0].mxu0
  %v952 = vadd.f32 %v912, %v951
  %v953 = vpop.f32.mrb[0].mxu0
  %v954 = vpop.f32.mrb[0].mxu0
  %v955 = vpop.f32.mrb[0].mxu0
  %956 = vdwg.mxu0
  %957 = vmatprep.subr.bf16.mxu0 0
  %958 = vmatpush1.bf16.msra.mxu0 %v658
  %959 = vmatprep.subr.bf16.mxu0 0
  %960 = vmatpush1.bf16.msra.mxu0 %v659
  %961 = vmatprep.subr.bf16.mxu0 0
  %962 = vmatpush1.bf16.msra.mxu0 %v660
  %963 = vmatprep.subr.bf16.mxu0 0
  %964 = vmatpush1.bf16.msra.mxu0 %v661
  %965 = vmatprep.subr.bf16.mxu0 0
  %966 = vmatpush1.bf16.msra.mxu0 %v662
  %967 = vmatprep.subr.bf16.mxu0 0
  %968 = vmatpush1.bf16.msra.mxu0 %v755
  %969 = vmatprep.subr.bf16.mxu0 0
  %970 = vmatpush1.bf16.msra.mxu0 0
  %971 = vmatprep.subr.bf16.mxu0 0
  %972 = vmatpush1.bf16.msra.mxu0 0
  %973 = vmatprep.subr.bf16.mxu0 0
  %974 = vmatpush1.bf16.msra.mxu0 0
  %975 = vmatprep.subr.bf16.mxu0 0
  %976 = vmatpush1.bf16.msra.mxu0 0
  %977 = vmatprep.subr.bf16.mxu0 0
  %978 = vmatpush1.bf16.msra.mxu0 0
  %979 = vmatprep.subr.bf16.mxu0 0
  %980 = vmatpush1.bf16.msra.mxu0 0
  %981 = vmatprep.subr.bf16.mxu0 0
  %982 = vmatpush1.bf16.msra.mxu0 0
  %983 = vmatprep.subr.bf16.mxu0 0
  %984 = vmatpush1.bf16.msra.mxu0 0
  %985 = vmatprep.subr.bf16.mxu0 0
  %986 = vmatpush1.bf16.msra.mxu0 0
  %987 = vmatprep.subr.bf16.mxu0 0
  %988 = vmatpush1.bf16.msra.mxu0 0
  %989 = vmatprep.mubr.bf16.mxu0 0
  %990 = vmatmul.mubr.bf16.gmra.mrb[0].mxu0 %v751
  %v991 = vpop.f32.mrb[0].mxu0
  %v992 = vadd.f32 %v952, %v991
  %v993 = vpop.f32.mrb[0].mxu0
  %v994 = vpop.f32.mrb[0].mxu0
  %v995 = vpop.f32.mrb[0].mxu0
  %996 = vdwg.mxu0
  %v997 = vld [vmem:[%s2] sm:$0x1]
  %v998 = vadd.f32 %v997, 1e-08
  %v999 = vrcp.pop %v998
  %v1000 = vmul.f32 1372.0, %v999
  %v1001 = vmax.f32 %v997, 0.0
  %v1002 = vmin.f32 %v1001, 1.0
  %v1003 = vmul.f32 %v1000, %v1002
  %v1005 = vlaneseq
  %v1006 = vshrl.u32 %v1005, 7
  %v1007 = vsub.s32 0, %v1006
  %v1008 = vrot.slane %v1003, %v1007
  %v1010 = vmul.f32 %v992, %v1008
  %v1011 = vpack.c.bf16 %v1010, %v1010
  %1012 = vst [vmem:[%s3] sm:$0xf] %v1011
  %1013 = vadd.xlane.f32.xlu0 %v1010
  %v1014 = vpop.xlane.xlu0 %1013
  %v1015 = vmul.f32 %v1010, %v1010
  %1016 = vadd.xlane.f32.xlu0 %v1015
  %v1017 = vpop.xlane.xlu0 %1016
  %1018 = vst [vmem:[%s4] sm:$0xff] %v1014
  %1019 = vst [vmem:[%s5] sm:$0xff] %v1017
  // Predicated region
  $region14: #{inpainting_down_double_conv3d.4} parent=0 // pred_check
    _
  $region15: #{inpainting_down_double_conv3d.4} parent=0 // pred_check_branch
    %1021 = sbr.rel (0) target = $region17
  $region16: #{inpainting_down_double_conv3d.4} parent=0 // pred_region
    _
  $region17: #{inpainting_down_double_conv3d.4} parent=0 // pred_fallthru
    _
  // Predicated region
  $region18: #{inpainting_down_double_conv3d.4} parent=0 // pred_check
    _
  $region19: #{inpainting_down_double_conv3d.4} parent=0 // pred_check_branch
    %1023 = sbr.rel (0) target = $region21
  $region20: #{inpainting_down_double_conv3d.4} parent=0 // pred_region
    _
  $region21: #{inpainting_down_double_conv3d.4} parent=0 // pred_fallthru
    _
  // Predicated region
  $region22: #{inpainting_down_double_conv3d.4} parent=0 // pred_check
    _
  $region23: #{inpainting_down_double_conv3d.4} parent=0 // pred_check_branch
    %1025 = sbr.rel (0) target = $region25
  $region24: #{inpainting_down_double_conv3d.4} parent=0 // pred_region
    _
  $region25: #{inpainting_down_double_conv3d.4} parent=0 // pred_fallthru
    _
  // Predicated region
  $region26: #{inpainting_down_double_conv3d.4} parent=0 // pred_check
    _
  $region27: #{inpainting_down_double_conv3d.4} parent=0 // pred_check_branch
    %1027 = sbr.rel (0) target = $region29
  $region28: #{inpainting_down_double_conv3d.4} parent=0 // pred_region
    _
  $region29: #{inpainting_down_double_conv3d.4} parent=0 // pred_fallthru
    _
  // Predicated region
  $region30: #{inpainting_down_double_conv3d.4} parent=0 // pred_check
    _
  $region31: #{inpainting_down_double_conv3d.4} parent=0 // pred_check_branch
    %1029 = sbr.rel (0) target = $region33
  $region32: #{inpainting_down_double_conv3d.4} parent=0 // pred_region
    _
  $region33: #{inpainting_down_double_conv3d.4} parent=0 // pred_fallthru
    _
  // Predicated region
  $region34: #{inpainting_down_double_conv3d.4} parent=0 // pred_check
    _
  $region35: #{inpainting_down_double_conv3d.4} parent=0 // pred_check_branch
    %1031 = sbr.rel (0) target = $region37
  $region36: #{inpainting_down_double_conv3d.4} parent=0 // pred_region
    _
  $region37: #{inpainting_down_double_conv3d.4} parent=0 // pred_fallthru
    _

// kernel: inpainting_down_double_conv3d.6
$region0: #{inpainting_down_double_conv3d.6}
  #allocation0 [shape = 'u32[]', space=smem, size = 0x4, offset = 0x4, fixed_abs, tag = 'smem constant byte address 0x4 - core index']
  #allocation1 [shape = 'u32[144,128]{1,0:T(1,128)}', space=vmem, size = 0x12000, scoped, tag = 'internal scratch']
  %s0 = inlined_call_operand.vmem [shape: bf16[8,216], index: 0, kind: input, shape index: {}]
  %s1 = inlined_call_operand.vmem [shape: bf16[216,128], index: 1, kind: input, shape index: {}]
  %s2 = inlined_call_operand.vmem [shape: f32[1,128], index: 2, kind: input, shape index: {}]
  %s3 = inlined_call_operand.vmem [shape: bf16[8,128], index: 3, kind: output, shape index: {0}]
  %s4 = inlined_call_operand.vmem [shape: f32[8,128], index: 4, kind: output, shape index: {1}]
  %s5 = inlined_call_operand.vmem [shape: f32[8,128], index: 5, kind: output, shape index: {2}]
  %6 = xla_tuple %s3, %s4, %s5
  %s7 = sld [smem:[#allocation0]]
  $region38: #{inpainting_down_double_conv3d.6} parent=0
    _
  %s9 = ssub.s32 1, %s7
  %s10 = scalar_select 0, %s9, %s7
  // Predicated region
  $region2: #{inpainting_down_double_conv3d.6} parent=0 // pred_check
    _
  $region3: #{inpainting_down_double_conv3d.6} parent=0 // pred_check_branch
    %12 = sbr.rel (0) target = $region5
  $region4: #{inpainting_down_double_conv3d.6} parent=0 // pred_region
    _
  $region5: #{inpainting_down_double_conv3d.6} parent=0 // pred_fallthru
    _
  // Predicated region
  $region6: #{inpainting_down_double_conv3d.6} parent=0 // pred_check
    _
  $region7: #{inpainting_down_double_conv3d.6} parent=0 // pred_check_branch
    %14 = sbr.rel (0) target = $region9
  $region8: #{inpainting_down_double_conv3d.6} parent=0 // pred_region
    _
  $region9: #{inpainting_down_double_conv3d.6} parent=0 // pred_fallthru
    _
  // Predicated region
  $region10: #{inpainting_down_double_conv3d.6} parent=0 // pred_check
    _
  $region11: #{inpainting_down_double_conv3d.6} parent=0 // pred_check_branch
    %16 = sbr.rel (0) target = $region13
  $region12: #{inpainting_down_double_conv3d.6} parent=0 // pred_region
    _
  $region13: #{inpainting_down_double_conv3d.6} parent=0 // pred_fallthru
    _
  %v18 = vld [vmem:[%s0] sm:$0xff]
  %v19 = vld [vmem:[%s1] sm:$0xf]
  %v20 = vld [vmem:[%s1 + $0x4] sm:$0xf]
  %v21 = vld [vmem:[%s1 + $0x8] sm:$0xf]
  %v22 = vld [vmem:[%s1 + $0xc] sm:$0xf]
  %v23 = vld [vmem:[%s1 + $0x10] sm:$0xf]
  %v24 = vld [vmem:[%s1 + $0x14] sm:$0xf]
  %v25 = vld [vmem:[%s1 + $0x18] sm:$0xf]
  %v26 = vld [vmem:[%s1 + $0x1c] sm:$0xf]
  %v27 = vld [vmem:[%s1 + $0x20] sm:$0xf]
  %v28 = vld [vmem:[%s1 + $0x24] sm:$0xf]
  %v29 = vld [vmem:[%s1 + $0x28] sm:$0xf]
  %v30 = vld [vmem:[%s1 + $0x2c] sm:$0xf]
  %v31 = vld [vmem:[%s1 + $0x30] sm:$0xf]
  %v32 = vld [vmem:[%s1 + $0x34] sm:$0xf]
  %v33 = vld [vmem:[%s1 + $0x38] sm:$0xf]
  %v34 = vld [vmem:[%s1 + $0x3c] sm:$0xf]
  %v35 = vld [vmem:[%s1 + $0x40] sm:$0xf]
  %v36 = vld [vmem:[%s1 + $0x44] sm:$0xf]
  %v37 = vld [vmem:[%s1 + $0x48] sm:$0xf]
  %v38 = vld [vmem:[%s1 + $0x4c] sm:$0xf]
  %v39 = vld [vmem:[%s1 + $0x50] sm:$0xf]
  %v40 = vld [vmem:[%s1 + $0x54] sm:$0xf]
  %v41 = vld [vmem:[%s1 + $0x58] sm:$0xf]
  %v42 = vld [vmem:[%s1 + $0x5c] sm:$0xf]
  %v43 = vld [vmem:[%s1 + $0x60] sm:$0xf]
  %v44 = vld [vmem:[%s1 + $0x64] sm:$0xf]
  %v45 = vld [vmem:[%s1 + $0x68] sm:$0xf]
  %v47 = vunpack.c.l.b16 %v18
  %v48 = vunpack.c.h.b16 %v18
  %v49 = vpack.c.b16 %v47, %v47
  %v50 = vpack.c.b16 %v48, %v48
  %v79 = vunpack.c.l.b16 %v19
  %v80 = vunpack.c.l.b16 %v20
  %v81 = vunpack.c.l.b16 %v21
  %v82 = vunpack.c.l.b16 %v22
  %v83 = vunpack.c.l.b16 %v23
  %v84 = vunpack.c.l.b16 %v24
  %v85 = vunpack.c.l.b16 %v25
  %v86 = vunpack.c.l.b16 %v26
  %v87 = vunpack.c.l.b16 %v27
  %v88 = vunpack.c.l.b16 %v28
  %v89 = vunpack.c.l.b16 %v29
  %v90 = vunpack.c.l.b16 %v30
  %v91 = vunpack.c.l.b16 %v31
  %v92 = vunpack.c.l.b16 %v32
  %v93 = vunpack.c.l.b16 %v33
  %v94 = vunpack.c.l.b16 %v34
  %v95 = vunpack.c.l.b16 %v35
  %v96 = vunpack.c.l.b16 %v36
  %v97 = vunpack.c.l.b16 %v37
  %v98 = vunpack.c.l.b16 %v38
  %v99 = vunpack.c.l.b16 %v39
  %v100 = vunpack.c.l.b16 %v40
  %v101 = vunpack.c.l.b16 %v41
  %v102 = vunpack.c.l.b16 %v42
  %v103 = vunpack.c.l.b16 %v43
  %v104 = vunpack.c.l.b16 %v44
  %v105 = vunpack.c.l.b16 %v45
  %v106 = vpack.c.b16 %v80, %v79
  %v107 = vpack.c.b16 %v82, %v81
  %v108 = vpack.c.b16 %v84, %v83
  %v109 = vpack.c.b16 %v86, %v85
  %v110 = vpack.c.b16 %v88, %v87
  %v111 = vpack.c.b16 %v90, %v89
  %v112 = vpack.c.b16 %v92, %v91
  %v113 = vpack.c.b16 %v94, %v93
  %v114 = vpack.c.b16 %v96, %v95
  %v115 = vpack.c.b16 %v98, %v97
  %v116 = vpack.c.b16 %v100, %v99
  %v117 = vpack.c.b16 %v102, %v101
  %v118 = vpack.c.b16 %v104, %v103
  %v119 = vpack.c.b16 %v105, %v105
  %vm133 = vcmask 719872
  %v135 = vsel %vm133, %v50, 0
  %vm137 = vcmask 1043456
  %v139 = vsel %vm137, %v119, 0
  %141 = vmatprep.subr.bf16.mxu0 0
  %142 = vmatpush1.bf16.msra.mxu0 %v106
  %143 = vmatprep.subr.bf16.mxu0 0
  %144 = vmatpush1.bf16.msra.mxu0 %v107
  %145 = vmatprep.subr.bf16.mxu0 0
  %146 = vmatpush1.bf16.msra.mxu0 %v108
  %147 = vmatprep.subr.bf16.mxu0 0
  %148 = vmatpush1.bf16.msra.mxu0 %v109
  %149 = vmatprep.subr.bf16.mxu0 0
  %150 = vmatpush1.bf16.msra.mxu0 %v110
  %151 = vmatprep.subr.bf16.mxu0 0
  %152 = vmatpush1.bf16.msra.mxu0 %v111
  %153 = vmatprep.subr.bf16.mxu0 0
  %154 = vmatpush1.bf16.msra.mxu0 %v112
  %155 = vmatprep.subr.bf16.mxu0 0
  %156 = vmatpush1.bf16.msra.mxu0 %v113
  %157 = vmatprep.subr.bf16.mxu0 0
  %158 = vmatpush1.bf16.msra.mxu0 %v114
  %159 = vmatprep.subr.bf16.mxu0 0
  %160 = vmatpush1.bf16.msra.mxu0 %v115
  %161 = vmatprep.subr.bf16.mxu0 0
  %162 = vmatpush1.bf16.msra.mxu0 %v116
  %163 = vmatprep.subr.bf16.mxu0 0
  %164 = vmatpush1.bf16.msra.mxu0 %v117
  %165 = vmatprep.subr.bf16.mxu0 0
  %166 = vmatpush1.bf16.msra.mxu0 %v118
  %167 = vmatprep.subr.bf16.mxu0 0
  %168 = vmatpush1.bf16.msra.mxu0 %v139
  %169 = vmatprep.subr.bf16.mxu0 0
  %170 = vmatpush1.bf16.msra.mxu0 0
  %171 = vmatprep.subr.bf16.mxu0 0
  %172 = vmatpush1.bf16.msra.mxu0 0
  %173 = vmatprep.mubr.bf16.mxu0 %v135
  %174 = vmatmul.mubr.bf16.gmra.mrb[0].mxu0 %v49
  %v175 = vpop.f32.mrb[0].mxu0
  %v176 = vadd.f32 0.0, %v175
  %v177 = vpop.f32.mrb[0].mxu0
  %v178 = vpop.f32.mrb[0].mxu0
  %v179 = vpop.f32.mrb[0].mxu0
  %180 = vdwg.mxu0
  %v181 = vld [vmem:[%s2] sm:$0x1]
  %v182 = vadd.f32 %v181, 1e-08
  %v183 = vrcp.pop %v182
  %v184 = vmul.f32 216.0, %v183
  %v185 = vmax.f32 %v181, 0.0
  %v186 = vmin.f32 %v185, 1.0
  %v187 = vmul.f32 %v184, %v186
  %v189 = vlaneseq
  %v190 = vshrl.u32 %v189, 7
  %v191 = vsub.s32 0, %v190
  %v192 = vrot.slane %v187, %v191
  %v194 = vmul.f32 %v176, %v192
  %v195 = vpack.c.bf16 %v194, %v194
  %196 = vst [vmem:[%s3] sm:$0xf] %v195
  %197 = vadd.xlane.f32.xlu0 %v194
  %v198 = vpop.xlane.xlu0 %197
  %v199 = vmul.f32 %v194, %v194
  %200 = vadd.xlane.f32.xlu0 %v199
  %v201 = vpop.xlane.xlu0 %200
  %202 = vst [vmem:[%s4] sm:$0xff] %v198
  %203 = vst [vmem:[%s5] sm:$0xff] %v201
  // Predicated region
  $region14: #{inpainting_down_double_conv3d.6} parent=0 // pred_check
    _
  $region15: #{inpainting_down_double_conv3d.6} parent=0 // pred_check_branch
    %205 = sbr.rel (0) target = $region17
  $region16: #{inpainting_down_double_conv3d.6} parent=0 // pred_region
    _
  $region17: #{inpainting_down_double_conv3d.6} parent=0 // pred_fallthru
    _
  // Predicated region
  $region18: #{inpainting_down_double_conv3d.6} parent=0 // pred_check
    _
  $region19: #{inpainting_down_double_conv3d.6} parent=0 // pred_check_branch
    %207 = sbr.rel (0) target = $region21
  $region20: #{inpainting_down_double_conv3d.6} parent=0 // pred_region
    _
  $region21: #{inpainting_down_double_conv3d.6} parent=0 // pred_fallthru
    _
  // Predicated region
  $region22: #{inpainting_down_double_conv3d.6} parent=0 // pred_check
    _
  $region23: #{inpainting_down_double_conv3d.6} parent=0 // pred_check_branch
    %209 = sbr.rel (0) target = $region25
  $region24: #{inpainting_down_double_conv3d.6} parent=0 // pred_region
    _
  $region25: #{inpainting_down_double_conv3d.6} parent=0 // pred_fallthru
    _
  // Predicated region
  $region26: #{inpainting_down_double_conv3d.6} parent=0 // pred_check
    _
  $region27: #{inpainting_down_double_conv3d.6} parent=0 // pred_check_branch
    %211 = sbr.rel (0) target = $region29
  $region28: #{inpainting_down_double_conv3d.6} parent=0 // pred_region
    _
  $region29: #{inpainting_down_double_conv3d.6} parent=0 // pred_fallthru
    _
  // Predicated region
  $region30: #{inpainting_down_double_conv3d.6} parent=0 // pred_check
    _
  $region31: #{inpainting_down_double_conv3d.6} parent=0 // pred_check_branch
    %213 = sbr.rel (0) target = $region33
  $region32: #{inpainting_down_double_conv3d.6} parent=0 // pred_region
    _
  $region33: #{inpainting_down_double_conv3d.6} parent=0 // pred_fallthru
    _
  // Predicated region
  $region34: #{inpainting_down_double_conv3d.6} parent=0 // pred_check
    _
  $region35: #{inpainting_down_double_conv3d.6} parent=0 // pred_check_branch
    %215 = sbr.rel (0) target = $region37
  $region36: #{inpainting_down_double_conv3d.6} parent=0 // pred_region
    _
  $region37: #{inpainting_down_double_conv3d.6} parent=0 // pred_fallthru
    _

// kernel: inpainting_down_double_conv3d.7
$region0: #{inpainting_down_double_conv3d.7}
  #allocation0 [shape = 'u32[]', space=smem, size = 0x4, offset = 0x4, fixed_abs, tag = 'smem constant byte address 0x4 - core index']
  #allocation1 [shape = 'u32[144,128]{1,0:T(1,128)}', space=vmem, size = 0x12000, scoped, tag = 'internal scratch']
  %s0 = inlined_call_operand.vmem [shape: bf16[8,128], index: 0, kind: input, shape index: {}]
  %s1 = inlined_call_operand.vmem [shape: f32[8,128], index: 1, kind: input, shape index: {}]
  %s2 = inlined_call_operand.vmem [shape: f32[8,128], index: 2, kind: input, shape index: {}]
  %s3 = inlined_call_operand.vmem [shape: f32[8,128], index: 3, kind: output, shape index: {}]
  %s4 = sld [smem:[#allocation0]]
  $region22: #{inpainting_down_double_conv3d.7} parent=0
    _
  %s6 = ssub.s32 1, %s4
  %s7 = scalar_select 0, %s6, %s4
  // Predicated region
  $region2: #{inpainting_down_double_conv3d.7} parent=0 // pred_check
    _
  $region3: #{inpainting_down_double_conv3d.7} parent=0 // pred_check_branch
    %9 = sbr.rel (0) target = $region5
  $region4: #{inpainting_down_double_conv3d.7} parent=0 // pred_region
    _
  $region5: #{inpainting_down_double_conv3d.7} parent=0 // pred_fallthru
    _
  // Predicated region
  $region6: #{inpainting_down_double_conv3d.7} parent=0 // pred_check
    _
  $region7: #{inpainting_down_double_conv3d.7} parent=0 // pred_check_branch
    %11 = sbr.rel (0) target = $region9
  $region8: #{inpainting_down_double_conv3d.7} parent=0 // pred_region
    _
  $region9: #{inpainting_down_double_conv3d.7} parent=0 // pred_fallthru
    _
  // Predicated region
  $region10: #{inpainting_down_double_conv3d.7} parent=0 // pred_check
    _
  $region11: #{inpainting_down_double_conv3d.7} parent=0 // pred_check_branch
    %13 = sbr.rel (0) target = $region13
  $region12: #{inpainting_down_double_conv3d.7} parent=0 // pred_region
    _
  $region13: #{inpainting_down_double_conv3d.7} parent=0 // pred_fallthru
    _
  %v14 = vld [vmem:[%s0] sm:$0xf]
  %v15 = vunpack.c.l.bf16 %v14
  %v16 = vld [vmem:[%s1] sm:$0xff]
  %18 = vset.pattern.permute.xlu0 0
  %19 = vperm.xlu0 %18, %v16
  %v20 = vpop.permute.xlu0 %19
  %v22 = vmul.f32 %v15, %v20
  %v23 = vld [vmem:[%s2] sm:$0xff]
  %25 = vset.pattern.permute.xlu0 0
  %26 = vperm.xlu0 %25, %v23
  %v27 = vpop.permute.xlu0 %26
  %v29 = vadd.f32 %v22, %v27
  %v30 = vxor.u32 %v29, 2147483648
  %v31 = vmul.f32 %v30, 1.442695
  %v32 = vpow.pop %v31
  %v33 = vadd.f32 %v32, 1.0
  %v34 = vrcp.pop %v33
  %v35 = vmul.f32 1.0, %v34
  %v36 = vmul.f32 %v29, %v35
  %37 = vst [vmem:[%s3] sm:$0xff] %v36
  // Predicated region
  $region14: #{inpainting_down_double_conv3d.7} parent=0 // pred_check
    _
  $region15: #{inpainting_down_double_conv3d.7} parent=0 // pred_check_branch
    %39 = sbr.rel (0) target = $region17
  $region16: #{inpainting_down_double_conv3d.7} parent=0 // pred_region
    _
  $region17: #{inpainting_down_double_conv3d.7} parent=0 // pred_fallthru
    _
  // Predicated region
  $region18: #{inpainting_down_double_conv3d.7} parent=0 // pred_check
    _
  $region19: #{inpainting_down_double_conv3d.7} parent=0 // pred_check_branch
    %41 = sbr.rel (0) target = $region21
  $region20: #{inpainting_down_double_conv3d.7} parent=0 // pred_region
    _
  $region21: #{inpainting_down_double_conv3d.7} parent=0 // pred_fallthru
    _

</llo_original>
